<compile_context>
chip_gen: v6e
topology: v6e:2x2x1
jax: 0.10.0
libtpu: 0.0.40
codegen_flags: <defaults>
</compile_context>

<pallas_src>
import jax
import jax.numpy as jnp
from jax import lax
from jax.experimental import pallas as pl
from jax.experimental.pallas import tpu as pltpu


def _make_kernel(n_classes):
    def kernel(x_ref, sel_t_ref, thr_ref, g2_ref, expand_ref, localj_ref,
               leaf_hi_ref, leaf_lo_ref, out_ref):
        x = x_ref[...]                                        # [tn, D] f32

        # (1) Feature gather for every (tree, level).  HIGHEST is kept *only*
        # here: arbitrary f32 feature values must survive the MXU so a value
        # sitting next to its threshold cannot flip the split decision.
        feats = lax.dot_general(
            x, sel_t_ref[...], (((1,), (0,)), ((), ())),
            precision=lax.Precision.HIGHEST,
            preferred_element_type=jnp.float32)               # [tn, L*T]

        # (2) All T*L split decisions on the VPU; 0/1 is exact in bf16.
        bits = (feats > thr_ref[...]).astype(jnp.bfloat16)    # [tn, L*T]

        # (3) Compact pow2 reduction -> per-tree leaf index.  bf16 operands
        # (0/1 bits, 2^l weights) are exact and the MXU accumulates in f32,
        # so DEFAULT precision is bit-identical and a single MXU pass.
        leaf_f = lax.dot_general(
            bits, g2_ref[...], (((1,), (0,)), ((), ())),
            preferred_element_type=jnp.float32)               # [tn, T]

        # (4) Replicate each tree's (exact, <= 2^L-1) integer leaf index
        # across its 2^L leaf columns with a tiny 0/1 bf16 matmul, then
        # integer-compare to build the block one-hot on the VPU.
        leaf_rep = lax.dot_general(
            leaf_f.astype(jnp.bfloat16), expand_ref[...],
            (((1,), (0,)), ((), ())),
            preferred_element_type=jnp.float32)               # [tn, T*2^L]
        leaf_idx = (leaf_rep + 0.5).astype(jnp.int32)         # exact ints; +0.5 guards truncation
        onehot = (leaf_idx == localj_ref[...]).astype(jnp.bfloat16)   # [tn, T*2^L]

        # (5) Leaf lookup; the K-reduction over T*2^L sums all tree
        # contributions.  hi/lo bf16 split of the f32 leaf table gives ~f32
        # accuracy with two DEFAULT passes (instead of HIGHEST's 3-6).
        logits = jnp.dot(onehot, leaf_hi_ref[...],
                         preferred_element_type=jnp.float32)
        logits = logits + jnp.dot(onehot, leaf_lo_ref[...],
                                  preferred_element_type=jnp.float32)  # [tn, Cpad]

        # (6) Mask the lane padding, softmax == predict_proba, lane-dense store.
        lane = lax.broadcasted_iota(jnp.int32, logits.shape, 1)
        logits = jnp.where(lane < n_classes, logits, -1e30)
        m = jnp.max(logits, axis=-1, keepdims=True)
        e = jnp.exp(logits - m)
        out_ref[...] = (e / jnp.sum(e, axis=-1, keepdims=True)).astype(out_ref.dtype)

    return kernel


def xgboost_predict_proba(x, selectors, thresholds, leaf_values, *, row_tile=None):
    """x: [N, D]; selectors: [T, L, D] one-hot; thresholds: [T, 1, L];
    leaf_values: [T, 2^L, C]  ->  probs: [N, C] (rows sum to 1)."""
    x = jnp.asarray(x, jnp.float32)
    N, D = x.shape
    T, L, _ = selectors.shape
    NL, C = leaf_values.shape[1], leaf_values.shape[2]
    assert NL == 2 ** L, "leaf_values must have 2^L leaves per tree"
    assert L <= 8, "leaf ids up to 2^L-1 must stay exact in bf16"

    # ---- Row tiling: no divisibility requirement (rows are zero-padded and
    # the tail sliced off outside).  Default keeps >=2 row tiles when possible
    # (v7x megacore needs >=2 steps on the "parallel" axis), 8-aligned, capped
    # at 512 rows (VMEM-safe on v7x's 64 MiB; v6e's 128 MiB can take 1024). ----
    if row_tile is None:
        row_tile = ((N // 2) // 8) * 8 if N >= 16 else 8
        row_tile = max(8, min(512, row_tile))
    row_tile = max(8, (int(row_tile) // 8) * 8)
    n_tiles = (N + row_tile - 1) // row_tile
    n_pad = n_tiles * row_tile
    x_pad = jnp.pad(x, ((0, n_pad - N), (0, 0))) if n_pad != N else x

    # ---- Wrapper-side parameter packing (done once, outside the kernel). ----
    # Level-major flatten + pre-transpose: column l*T + t is the split feature
    # of tree t at depth l.  No transpose happens inside the kernel.
    sel_t = jnp.transpose(selectors, (1, 0, 2)).reshape(L * T, D).T
    sel_t = sel_t.astype(jnp.float32)                                    # [D, L*T]
    thr_flat = thresholds[:, 0, :].T.reshape(1, L * T).astype(jnp.float32)  # [1, L*T]

    # Compact pow2 reduction: g2[l*T + t, t] = 2^l (exact in bf16).
    r = jnp.arange(L * T)
    g2 = jnp.where((r % T)[:, None] == jnp.arange(T)[None, :],
                   (2.0 ** (r // T).astype(jnp.float32))[:, None],
                   0.0).astype(jnp.bfloat16)                             # [L*T, T]

    # 0/1 expansion: replicate tree t's leaf index across its 2^L columns.
    col = jnp.arange(T * NL)
    e_expand = (jnp.arange(T)[:, None] == (col // NL)[None, :]
                ).astype(jnp.bfloat16)                                   # [T, T*2^L]
    local_j = (col % NL).astype(jnp.int32).reshape(1, T * NL)            # [1, T*2^L]

    # Leaf table: bf16 hi/lo split of the f32 values, class dim zero-padded to
    # a lane-dense 128 multiple (masked before the softmax, sliced outside).
    c_pad = max(128, ((C + 127) // 128) * 128)
    leaves = leaf_values.reshape(T * NL, C).astype(jnp.float32)
    leaves = jnp.pad(leaves, ((0, 0), (0, c_pad - C)))
    leaves_hi = leaves.astype(jnp.bfloat16)
    leaves_lo = (leaves - leaves_hi.astype(jnp.float32)).astype(jnp.bfloat16)

    kernel = _make_kernel(C)

    # Explicit VMEM limit (v5e's scoped default is only 16 MiB): small kernels
    # get a safe 32 MiB floor, larger ones scale up, capped at 64 MiB (v7x).
    param_bytes = ((sel_t.size + thr_flat.size + local_j.size) * 4
                   + (g2.size + e_expand.size + leaves_hi.size + leaves_lo.size) * 2)
    tile_bytes = row_tile * (D + c_pad) * 4
    vmem_limit = int(min(64 * 2 ** 20, max(32 * 2 ** 20,
                                           2 * param_bytes + 6 * tile_bytes)))

    def call(param_mode):
        def const_spec(shape):
            # All ensemble parameters are resident (constant index map).
            if param_mode is None:
                return pl.BlockSpec(shape, lambda i: (0, 0))
            return pl.BlockSpec(shape, lambda i: (0, 0), pipeline_mode=param_mode)

        return pl.pallas_call(
            kernel,
            out_shape=jax.ShapeDtypeStruct((n_pad, c_pad), jnp.float32),
            grid_spec=pltpu.PrefetchScalarGridSpec(
                num_scalar_prefetch=0,
                grid=(n_tiles,),
                in_specs=[
                    pl.BlockSpec((row_tile, D), lambda i: (i, 0)),  # x, row-tiled
                    const_spec((D, L * T)),        # selectors^T (resident)
                    const_spec((1, L * T)),        # thresholds (resident)
                    const_spec((L * T, T)),        # compact pow2 reduction
                    const_spec((T, T * NL)),       # tree-block expansion
                    const_spec((1, T * NL)),       # local leaf ids
                    const_spec((T * NL, c_pad)),   # leaf values (bf16 hi)
                    const_spec((T * NL, c_pad)),   # leaf values (bf16 lo)
                ],
                out_specs=pl.BlockSpec((row_tile, c_pad), lambda i: (i, 0)),
            ),
            compiler_params=pltpu.CompilerParams(
                dimension_semantics=("parallel",),   # row tiles are independent
                vmem_limit_bytes=vmem_limit,
            ),
        )(x_pad, sel_t, thr_flat, g2, e_expand, local_j, leaves_hi, leaves_lo)

    try:
        # Constant-index-map parameters never fetch a new block after step 0;
        # single buffering halves their resident VMEM footprint.
        out = jax.block_until_ready(call(pl.Buffered(1)))
    except Exception:  # pragma: no cover - fallback if Buffered(1) unsupported
        out = jax.block_until_ready(call(None))

    return out[:N, :C]


if __name__ == "__main__":
    # Small, deterministic synthetic setup.  N=18 exercises both the multi-step
    # grid (3 row tiles of 8) and the non-divisible-N padding path.
    N, D = 18, 32         # samples, embedding features
    T, L = 8, 3           # boosted trees, tree depth
    NL = 2 ** L           # leaves per tree
    C = 2                 # binary classifier -> 2-class predict_proba

    key = jax.random.PRNGKey(0)
    k_x, k_feat, k_thr, k_leaf = jax.random.split(key, 4)

    x = jax.random.normal(k_x, (N, D), dtype=jnp.float32)

    # Deterministic "trained" ensemble parameters.
    feat_idx = jax.random.randint(k_feat, (T, L), 0, D)                     # split features
    selectors = jax.nn.one_hot(feat_idx, D, dtype=jnp.float32)              # [T, L, D]
    thresholds = 0.5 * jax.random.normal(k_thr, (T, 1, L), jnp.float32)     # [T, 1, L]
    leaf_values = 0.3 * jax.random.normal(k_leaf, (T, NL, C), jnp.float32)  # [T, 2^L, C]

    probs = xgboost_predict_proba(x, selectors, thresholds, leaf_values)
    probs = jax.block_until_ready(probs)

    # Sanity: valid probability rows, correct shape/dtype.
    assert probs.shape == (N, C) and probs.dtype == jnp.float32
    assert jnp.allclose(jnp.sum(probs, axis=-1), 1.0, atol=1e-5)

    # Exact pure-f32 reference (direct gather, no matmul rounding anywhere).
    feats_ref = x[:, feat_idx]                                              # [N, T, L]
    bits_ref = (feats_ref > thresholds[:, 0, :][None, :, :]).astype(jnp.int32)
    leaf_ref = jnp.sum(bits_ref * (2 ** jnp.arange(L))[None, None, :], axis=-1)  # [N, T]
    gathered = leaf_values[jnp.arange(T)[None, :], leaf_ref]                # [N, T, C]
    logits_ref = jnp.sum(gathered, axis=1)                                  # [N, C]
    probs_ref = jax.nn.softmax(logits_ref, axis=-1)
    assert jnp.allclose(probs, probs_ref, atol=1e-5)

    print("KERNEL_OK")
</pallas_src>

<mosaic_0001>
module attributes {stable_mosaic.version = 11 : i64} {
  func.func @kernel(%arg0: i32, %arg1: memref<8x32xf32, #tpu.memory_space<vmem>>, %arg2: memref<32x24xf32, #tpu.memory_space<vmem>>, %arg3: memref<1x24xf32, #tpu.memory_space<vmem>>, %arg4: memref<24x8xbf16, #tpu.memory_space<vmem>>, %arg5: memref<8x64xbf16, #tpu.memory_space<vmem>>, %arg6: memref<1x64xi32, #tpu.memory_space<vmem>>, %arg7: memref<64x128xbf16, #tpu.memory_space<vmem>>, %arg8: memref<64x128xbf16, #tpu.memory_space<vmem>>, %arg9: memref<8x128xf32, #tpu.memory_space<vmem>>) attributes {dimension_semantics = [#tpu.dimension_semantics<parallel>], iteration_bounds = array<i64: 3>, scalar_prefetch = 0 : i64, scratch_operands = 0 : i64, tpu.core_type = #tpu.core_type<tc>, window_params = [{transform_indices = @transform_0, window_bounds = array<i64: 8, 32>}, {pipeline_mode = #tpu.pipeline_mode<synchronous>, transform_indices = @transform_1, window_bounds = array<i64: 32, 24>}, {pipeline_mode = #tpu.pipeline_mode<synchronous>, transform_indices = @transform_2, window_bounds = array<i64: 1, 24>}, {pipeline_mode = #tpu.pipeline_mode<synchronous>, transform_indices = @transform_3, window_bounds = array<i64: 24, 8>}, {pipeline_mode = #tpu.pipeline_mode<synchronous>, transform_indices = @transform_4, window_bounds = array<i64: 8, 64>}, {pipeline_mode = #tpu.pipeline_mode<synchronous>, transform_indices = @transform_5, window_bounds = array<i64: 1, 64>}, {pipeline_mode = #tpu.pipeline_mode<synchronous>, transform_indices = @transform_6, window_bounds = array<i64: 64, 128>}, {pipeline_mode = #tpu.pipeline_mode<synchronous>, transform_indices = @transform_7, window_bounds = array<i64: 64, 128>}, {transform_indices = @transform_8, window_bounds = array<i64: 8, 128>}]} {
    %c0 = arith.constant 0 : index
    %c0_0 = arith.constant 0 : index
    %0 = vector.load %arg1[%c0, %c0_0] : memref<8x32xf32, #tpu.memory_space<vmem>>, vector<8x32xf32>
    %c0_1 = arith.constant 0 : index
    %c0_2 = arith.constant 0 : index
    %1 = vector.load %arg2[%c0_1, %c0_2] : memref<32x24xf32, #tpu.memory_space<vmem>>, vector<32x24xf32>
    %cst = arith.constant dense<0.000000e+00> : vector<8x24xf32>
    %2 = tpu.matmul %0, %1, %cst {dimension_numbers = #tpu.dot_dimension_numbers<[1], [0], [0], [1], [0, 0, 1, 1], [], []>, precision = #tpu.contract_precision<fp32>} : vector<8x32xf32>, vector<32x24xf32>, vector<8x24xf32> -> vector<8x24xf32>
    %c0_3 = arith.constant 0 : index
    %c0_4 = arith.constant 0 : index
    %3 = vector.load %arg3[%c0_3, %c0_4] : memref<1x24xf32, #tpu.memory_space<vmem>>, vector<1x24xf32>
    %4 = vector.broadcast %3 : vector<1x24xf32> to vector<8x24xf32>
    %5 = arith.cmpf ogt, %2, %4 : vector<8x24xf32>
    %6 = arith.extui %5 : vector<8x24xi1> to vector<8x24xi32>
    %7 = arith.sitofp %6 : vector<8x24xi32> to vector<8x24xf32>
    %8 = arith.truncf %7 : vector<8x24xf32> to vector<8x24xbf16>
    %c0_5 = arith.constant 0 : index
    %c0_6 = arith.constant 0 : index
    %9 = vector.load %arg4[%c0_5, %c0_6] : memref<24x8xbf16, #tpu.memory_space<vmem>>, vector<24x8xbf16>
    %cst_7 = arith.constant dense<0.000000e+00> : vector<8x8xf32>
    %10 = tpu.matmul %8, %9, %cst_7 {dimension_numbers = #tpu.dot_dimension_numbers<[1], [0], [0], [1], [0, 0, 1, 1], [], []>} : vector<8x24xbf16>, vector<24x8xbf16>, vector<8x8xf32> -> vector<8x8xf32>
    %11 = arith.truncf %10 : vector<8x8xf32> to vector<8x8xbf16>
    %c0_8 = arith.constant 0 : index
    %c0_9 = arith.constant 0 : index
    %12 = vector.load %arg5[%c0_8, %c0_9] : memref<8x64xbf16, #tpu.memory_space<vmem>>, vector<8x64xbf16>
    %cst_10 = arith.constant dense<0.000000e+00> : vector<8x64xf32>
    %13 = tpu.matmul %11, %12, %cst_10 {dimension_numbers = #tpu.dot_dimension_numbers<[1], [0], [0], [1], [0, 0, 1, 1], [], []>} : vector<8x8xbf16>, vector<8x64xbf16>, vector<8x64xf32> -> vector<8x64xf32>
    %cst_11 = arith.constant 5.000000e-01 : f32
    %14 = vector.broadcast %cst_11 : f32 to vector<8x64xf32>
    %15 = arith.addf %13, %14 : vector<8x64xf32>
    %16 = arith.fptosi %15 : vector<8x64xf32> to vector<8x64xi32>
    %c0_12 = arith.constant 0 : index
    %c0_13 = arith.constant 0 : index
    %17 = vector.load %arg6[%c0_12, %c0_13] : memref<1x64xi32, #tpu.memory_space<vmem>>, vector<1x64xi32>
    %18 = vector.broadcast %17 : vector<1x64xi32> to vector<8x64xi32>
    %19 = arith.cmpi eq, %16, %18 : vector<8x64xi32>
    %20 = arith.extui %19 : vector<8x64xi1> to vector<8x64xi32>
    %21 = arith.sitofp %20 : vector<8x64xi32> to vector<8x64xf32>
    %22 = arith.truncf %21 : vector<8x64xf32> to vector<8x64xbf16>
    %c0_14 = arith.constant 0 : index
    %c0_15 = arith.constant 0 : index
    %23 = vector.load %arg7[%c0_14, %c0_15] : memref<64x128xbf16, #tpu.memory_space<vmem>>, vector<64x128xbf16>
    %cst_16 = arith.constant dense<0.000000e+00> : vector<8x128xf32>
    %24 = tpu.matmul %22, %23, %cst_16 {dimension_numbers = #tpu.dot_dimension_numbers<[1], [0], [0], [1], [0, 0, 1, 1], [], []>} : vector<8x64xbf16>, vector<64x128xbf16>, vector<8x128xf32> -> vector<8x128xf32>
    %c0_17 = arith.constant 0 : index
    %c0_18 = arith.constant 0 : index
    %25 = vector.load %arg8[%c0_17, %c0_18] : memref<64x128xbf16, #tpu.memory_space<vmem>>, vector<64x128xbf16>
    %cst_19 = arith.constant dense<0.000000e+00> : vector<8x128xf32>
    %26 = tpu.matmul %22, %25, %cst_19 {dimension_numbers = #tpu.dot_dimension_numbers<[1], [0], [0], [1], [0, 0, 1, 1], [], []>} : vector<8x64xbf16>, vector<64x128xbf16>, vector<8x128xf32> -> vector<8x128xf32>
    %27 = arith.addf %24, %26 : vector<8x128xf32>
    %28 = tpu.iota {dimensions = array<i32: 1>} : vector<8x128xi32>
    %c2_i32 = arith.constant 2 : i32
    %29 = vector.broadcast %c2_i32 : i32 to vector<8x128xi32>
    %30 = arith.cmpi slt, %28, %29 : vector<8x128xi32>
    %cst_20 = arith.constant -1.000000e+30 : f32
    %31 = vector.broadcast %cst_20 : f32 to vector<8x128xf32>
    %32 = arith.select %30, %27, %31 : vector<8x128xi1>, vector<8x128xf32>
    %cst_21 = arith.constant dense<0xFF800000> : vector<8xf32>
    %33 = vector.multi_reduction <maximumf>, %32, %cst_21 [1] : vector<8x128xf32> to vector<8xf32>
    %34 = vector.shape_cast %33 : vector<8xf32> to vector<8x1xf32>
    %35 = vector.broadcast %34 : vector<8x1xf32> to vector<8x128xf32>
    %36 = arith.subf %32, %35 : vector<8x128xf32>
    %37 = math.exp %36 : vector<8x128xf32>
    %cst_22 = arith.constant dense<0.000000e+00> : vector<8xf32>
    %38 = vector.multi_reduction <add>, %37, %cst_22 [1] : vector<8x128xf32> to vector<8xf32>
    %39 = vector.shape_cast %38 : vector<8xf32> to vector<8x1xf32>
    %40 = vector.broadcast %39 : vector<8x1xf32> to vector<8x128xf32>
    %41 = arith.divf %37, %40 : vector<8x128xf32>
    %c0_23 = arith.constant 0 : index
    %c0_24 = arith.constant 0 : index
    %42 = vector.load %arg9[%c0_23, %c0_24] : memref<8x128xf32, #tpu.memory_space<vmem>>, vector<8x128xf32>
    tpu.vector_store %arg9[%c0_23, %c0_24], %41 {strides = array<i32>} : memref<8x128xf32, #tpu.memory_space<vmem>>, vector<8x128xf32>,
    return
  }
  func.func @transform_0(%arg0: i32) -> (i32, i32) {
    %c0_i32 = arith.constant 0 : i32
    %c0_i32_0 = arith.constant 0 : i32
    return %arg0, %c0_i32 : i32, i32
  }
  func.func @transform_1(%arg0: i32) -> (i32, i32) {
    %c0_i32 = arith.constant 0 : i32
    %c0_i32_0 = arith.constant 0 : i32
    %c0_i32_1 = arith.constant 0 : i32
    return %c0_i32, %c0_i32_0 : i32, i32
  }
  func.func @transform_2(%arg0: i32) -> (i32, i32) {
    %c0_i32 = arith.constant 0 : i32
    %c0_i32_0 = arith.constant 0 : i32
    %c0_i32_1 = arith.constant 0 : i32
    return %c0_i32, %c0_i32_0 : i32, i32
  }
  func.func @transform_3(%arg0: i32) -> (i32, i32) {
    %c0_i32 = arith.constant 0 : i32
    %c0_i32_0 = arith.constant 0 : i32
    %c0_i32_1 = arith.constant 0 : i32
    return %c0_i32, %c0_i32_0 : i32, i32
  }
  func.func @transform_4(%arg0: i32) -> (i32, i32) {
    %c0_i32 = arith.constant 0 : i32
    %c0_i32_0 = arith.constant 0 : i32
    %c0_i32_1 = arith.constant 0 : i32
    return %c0_i32, %c0_i32_0 : i32, i32
  }
  func.func @transform_5(%arg0: i32) -> (i32, i32) {
    %c0_i32 = arith.constant 0 : i32
    %c0_i32_0 = arith.constant 0 : i32
    %c0_i32_1 = arith.constant 0 : i32
    return %c0_i32, %c0_i32_0 : i32, i32
  }
  func.func @transform_6(%arg0: i32) -> (i32, i32) {
    %c0_i32 = arith.constant 0 : i32
    %c0_i32_0 = arith.constant 0 : i32
    %c0_i32_1 = arith.constant 0 : i32
    return %c0_i32, %c0_i32_0 : i32, i32
  }
  func.func @transform_7(%arg0: i32) -> (i32, i32) {
    %c0_i32 = arith.constant 0 : i32
    %c0_i32_0 = arith.constant 0 : i32
    %c0_i32_1 = arith.constant 0 : i32
    return %c0_i32, %c0_i32_0 : i32, i32
  }
  func.func @transform_8(%arg0: i32) -> (i32, i32) {
    %c0_i32 = arith.constant 0 : i32
    %c0_i32_0 = arith.constant 0 : i32
    return %arg0, %c0_i32 : i32, i32
  }
}

module attributes {stable_mosaic.version = 11 : i64} {
  func.func @kernel(%arg0: i32, %arg1: memref<8x32xf32, #tpu.memory_space<vmem>>, %arg2: memref<32x24xf32, #tpu.memory_space<vmem>>, %arg3: memref<1x24xf32, #tpu.memory_space<vmem>>, %arg4: memref<24x8xbf16, #tpu.memory_space<vmem>>, %arg5: memref<8x64xbf16, #tpu.memory_space<vmem>>, %arg6: memref<1x64xi32, #tpu.memory_space<vmem>>, %arg7: memref<64x128xbf16, #tpu.memory_space<vmem>>, %arg8: memref<64x128xbf16, #tpu.memory_space<vmem>>, %arg9: memref<8x128xf32, #tpu.memory_space<vmem>>) attributes {dimension_semantics = [#tpu.dimension_semantics<parallel>], iteration_bounds = array<i64: 3>, scalar_prefetch = 0 : i64, scratch_operands = 0 : i64, tpu.core_type = #tpu.core_type<tc>, window_params = [{transform_indices = @transform_0, window_bounds = array<i64: 8, 32>}, {pipeline_mode = #tpu.pipeline_mode<synchronous>, transform_indices = @transform_1, window_bounds = array<i64: 32, 24>}, {pipeline_mode = #tpu.pipeline_mode<synchronous>, transform_indices = @transform_2, window_bounds = array<i64: 1, 24>}, {pipeline_mode = #tpu.pipeline_mode<synchronous>, transform_indices = @transform_3, window_bounds = array<i64: 24, 8>}, {pipeline_mode = #tpu.pipeline_mode<synchronous>, transform_indices = @transform_4, window_bounds = array<i64: 8, 64>}, {pipeline_mode = #tpu.pipeline_mode<synchronous>, transform_indices = @transform_5, window_bounds = array<i64: 1, 64>}, {pipeline_mode = #tpu.pipeline_mode<synchronous>, transform_indices = @transform_6, window_bounds = array<i64: 64, 128>}, {pipeline_mode = #tpu.pipeline_mode<synchronous>, transform_indices = @transform_7, window_bounds = array<i64: 64, 128>}, {transform_indices = @transform_8, window_bounds = array<i64: 8, 128>}]} {
    %c0 = arith.constant 0 : index
    %c0_0 = arith.constant 0 : index
    %0 = vector.load %arg1[%c0, %c0_0] : memref<8x32xf32, #tpu.memory_space<vmem>>, vector<8x32xf32>
    %c0_1 = arith.constant 0 : index
    %c0_2 = arith.constant 0 : index
    %1 = vector.load %arg2[%c0_1, %c0_2] : memref<32x24xf32, #tpu.memory_space<vmem>>, vector<32x24xf32>
    %cst = arith.constant dense<0.000000e+00> : vector<8x24xf32>
    %2 = tpu.matmul %0, %1, %cst {dimension_numbers = #tpu.dot_dimension_numbers<[1], [0], [0], [1], [0, 0, 1, 1], [], []>, precision = #tpu.contract_precision<fp32>} : vector<8x32xf32>, vector<32x24xf32>, vector<8x24xf32> -> vector<8x24xf32>
    %c0_3 = arith.constant 0 : index
    %c0_4 = arith.constant 0 : index
    %3 = vector.load %arg3[%c0_3, %c0_4] : memref<1x24xf32, #tpu.memory_space<vmem>>, vector<1x24xf32>
    %4 = vector.broadcast %3 : vector<1x24xf32> to vector<8x24xf32>
    %5 = arith.cmpf ogt, %2, %4 : vector<8x24xf32>
    %6 = arith.extui %5 : vector<8x24xi1> to vector<8x24xi32>
    %7 = arith.sitofp %6 : vector<8x24xi32> to vector<8x24xf32>
    %8 = arith.truncf %7 : vector<8x24xf32> to vector<8x24xbf16>
    %c0_5 = arith.constant 0 : index
    %c0_6 = arith.constant 0 : index
    %9 = vector.load %arg4[%c0_5, %c0_6] : memref<24x8xbf16, #tpu.memory_space<vmem>>, vector<24x8xbf16>
    %cst_7 = arith.constant dense<0.000000e+00> : vector<8x8xf32>
    %10 = tpu.matmul %8, %9, %cst_7 {dimension_numbers = #tpu.dot_dimension_numbers<[1], [0], [0], [1], [0, 0, 1, 1], [], []>} : vector<8x24xbf16>, vector<24x8xbf16>, vector<8x8xf32> -> vector<8x8xf32>
    %11 = arith.truncf %10 : vector<8x8xf32> to vector<8x8xbf16>
    %c0_8 = arith.constant 0 : index
    %c0_9 = arith.constant 0 : index
    %12 = vector.load %arg5[%c0_8, %c0_9] : memref<8x64xbf16, #tpu.memory_space<vmem>>, vector<8x64xbf16>
    %cst_10 = arith.constant dense<0.000000e+00> : vector<8x64xf32>
    %13 = tpu.matmul %11, %12, %cst_10 {dimension_numbers = #tpu.dot_dimension_numbers<[1], [0], [0], [1], [0, 0, 1, 1], [], []>} : vector<8x8xbf16>, vector<8x64xbf16>, vector<8x64xf32> -> vector<8x64xf32>
    %cst_11 = arith.constant 5.000000e-01 : f32
    %14 = vector.broadcast %cst_11 : f32 to vector<8x64xf32>
    %15 = arith.addf %13, %14 : vector<8x64xf32>
    %16 = arith.fptosi %15 : vector<8x64xf32> to vector<8x64xi32>
    %c0_12 = arith.constant 0 : index
    %c0_13 = arith.constant 0 : index
    %17 = vector.load %arg6[%c0_12, %c0_13] : memref<1x64xi32, #tpu.memory_space<vmem>>, vector<1x64xi32>
    %18 = vector.broadcast %17 : vector<1x64xi32> to vector<8x64xi32>
    %19 = arith.cmpi eq, %16, %18 : vector<8x64xi32>
    %20 = arith.extui %19 : vector<8x64xi1> to vector<8x64xi32>
    %21 = arith.sitofp %20 : vector<8x64xi32> to vector<8x64xf32>
    %22 = arith.truncf %21 : vector<8x64xf32> to vector<8x64xbf16>
    %c0_14 = arith.constant 0 : index
    %c0_15 = arith.constant 0 : index
    %23 = vector.load %arg7[%c0_14, %c0_15] : memref<64x128xbf16, #tpu.memory_space<vmem>>, vector<64x128xbf16>
    %cst_16 = arith.constant dense<0.000000e+00> : vector<8x128xf32>
    %24 = tpu.matmul %22, %23, %cst_16 {dimension_numbers = #tpu.dot_dimension_numbers<[1], [0], [0], [1], [0, 0, 1, 1], [], []>} : vector<8x64xbf16>, vector<64x128xbf16>, vector<8x128xf32> -> vector<8x128xf32>
    %c0_17 = arith.constant 0 : index
    %c0_18 = arith.constant 0 : index
    %25 = vector.load %arg8[%c0_17, %c0_18] : memref<64x128xbf16, #tpu.memory_space<vmem>>, vector<64x128xbf16>
    %cst_19 = arith.constant dense<0.000000e+00> : vector<8x128xf32>
    %26 = tpu.matmul %22, %25, %cst_19 {dimension_numbers = #tpu.dot_dimension_numbers<[1], [0], [0], [1], [0, 0, 1, 1], [], []>} : vector<8x64xbf16>, vector<64x128xbf16>, vector<8x128xf32> -> vector<8x128xf32>
    %27 = arith.addf %24, %26 : vector<8x128xf32>
    %28 = tpu.iota {dimensions = array<i32: 1>} : vector<8x128xi32>
    %c2_i32 = arith.constant 2 : i32
    %29 = vector.broadcast %c2_i32 : i32 to vector<8x128xi32>
    %30 = arith.cmpi slt, %28, %29 : vector<8x128xi32>
    %cst_20 = arith.constant -1.000000e+30 : f32
    %31 = vector.broadcast %cst_20 : f32 to vector<8x128xf32>
    %32 = arith.select %30, %27, %31 : vector<8x128xi1>, vector<8x128xf32>
    %cst_21 = arith.constant dense<0xFF800000> : vector<8xf32>
    %33 = vector.multi_reduction <maximumf>, %32, %cst_21 [1] : vector<8x128xf32> to vector<8xf32>
    %34 = vector.shape_cast %33 : vector<8xf32> to vector<8x1xf32>
    %35 = vector.broadcast %34 : vector<8x1xf32> to vector<8x128xf32>
    %36 = arith.subf %32, %35 : vector<8x128xf32>
    %37 = math.exp %36 : vector<8x128xf32>
    %cst_22 = arith.constant dense<0.000000e+00> : vector<8xf32>
    %38 = vector.multi_reduction <add>, %37, %cst_22 [1] : vector<8x128xf32> to vector<8xf32>
    %39 = vector.shape_cast %38 : vector<8xf32> to vector<8x1xf32>
    %40 = vector.broadcast %39 : vector<8x1xf32> to vector<8x128xf32>
    %41 = arith.divf %37, %40 : vector<8x128xf32>
    %c0_23 = arith.constant 0 : index
    %c0_24 = arith.constant 0 : index
    %42 = vector.load %arg9[%c0_23, %c0_24] : memref<8x128xf32, #tpu.memory_space<vmem>>, vector<8x128xf32>
    tpu.vector_store %arg9[%c0_23, %c0_24], %41 {strides = array<i32>} : memref<8x128xf32, #tpu.memory_space<vmem>>, vector<8x128xf32>,
    return
  }
  func.func @transform_0(%arg0: i32) -> (i32, i32) {
    %c0_i32 = arith.constant 0 : i32
    %c0_i32_0 = arith.constant 0 : i32
    return %arg0, %c0_i32 : i32, i32
  }
  func.func @transform_1(%arg0: i32) -> (i32, i32) {
    %c0_i32 = arith.constant 0 : i32
    %c0_i32_0 = arith.constant 0 : i32
    %c0_i32_1 = arith.constant 0 : i32
    return %c0_i32, %c0_i32_0 : i32, i32
  }
  func.func @transform_2(%arg0: i32) -> (i32, i32) {
    %c0_i32 = arith.constant 0 : i32
    %c0_i32_0 = arith.constant 0 : i32
    %c0_i32_1 = arith.constant 0 : i32
    return %c0_i32, %c0_i32_0 : i32, i32
  }
  func.func @transform_3(%arg0: i32) -> (i32, i32) {
    %c0_i32 = arith.constant 0 : i32
    %c0_i32_0 = arith.constant 0 : i32
    %c0_i32_1 = arith.constant 0 : i32
    return %c0_i32, %c0_i32_0 : i32, i32
  }
  func.func @transform_4(%arg0: i32) -> (i32, i32) {
    %c0_i32 = arith.constant 0 : i32
    %c0_i32_0 = arith.constant 0 : i32
    %c0_i32_1 = arith.constant 0 : i32
    return %c0_i32, %c0_i32_0 : i32, i32
  }
  func.func @transform_5(%arg0: i32) -> (i32, i32) {
    %c0_i32 = arith.constant 0 : i32
    %c0_i32_0 = arith.constant 0 : i32
    %c0_i32_1 = arith.constant 0 : i32
    return %c0_i32, %c0_i32_0 : i32, i32
  }
  func.func @transform_6(%arg0: i32) -> (i32, i32) {
    %c0_i32 = arith.constant 0 : i32
    %c0_i32_0 = arith.constant 0 : i32
    %c0_i32_1 = arith.constant 0 : i32
    return %c0_i32, %c0_i32_0 : i32, i32
  }
  func.func @transform_7(%arg0: i32) -> (i32, i32) {
    %c0_i32 = arith.constant 0 : i32
    %c0_i32_0 = arith.constant 0 : i32
    %c0_i32_1 = arith.constant 0 : i32
    return %c0_i32, %c0_i32_0 : i32, i32
  }
  func.func @transform_8(%arg0: i32) -> (i32, i32) {
    %c0_i32 = arith.constant 0 : i32
    %c0_i32_0 = arith.constant 0 : i32
    return %arg0, %c0_i32 : i32, i32
  }
}

</mosaic_0001>

<llo_original>
// kernel: tpu_custom_call.1
$region0: #{tpu_custom_call.1}
  #allocation0 [shape = 'u32[]', space=smem, size = 0x4, offset = 0x4, fixed_abs, tag = 'smem constant byte address 0x4 - core index']
  #allocation1 [shape = 'u32[144,128]{1,0:T(1,128)}', space=vmem, size = 0x12000, scoped, tag = 'internal scratch']
  %s0 = inlined_call_operand.hbm [shape: f32[24,32], index: 0, kind: input, shape index: {}]
  %s1 = inlined_call_operand.vmem [shape: f32[32,24], index: 1, kind: input, shape index: {}]
  %s2 = inlined_call_operand.vmem [shape: f32[1,24], index: 2, kind: input, shape index: {}]
  %s3 = inlined_call_operand.vmem [shape: bf16[24,8], index: 3, kind: input, shape index: {}]
  %s4 = inlined_call_operand.vmem [shape: bf16[8,64], index: 4, kind: input, shape index: {}]
  %s5 = inlined_call_operand.vmem [shape: s32[1,64], index: 5, kind: input, shape index: {}]
  %s6 = inlined_call_operand.vmem [shape: bf16[64,128], index: 6, kind: input, shape index: {}]
  %s7 = inlined_call_operand.vmem [shape: bf16[64,128], index: 7, kind: input, shape index: {}]
  %s8 = inlined_call_operand.hbm [shape: f32[24,128], index: 8, kind: output, shape index: {}]
  %s9 = sld [smem:[#allocation0]]
  $region69: #{tpu_custom_call.1} parent=0
    _
  %s11 = ssub.s32 1, %s9
  %s12 = scalar_select 0, %s11, %s9
  $region1: #{tpu_custom_call.1} parent=0
    #allocation2 [shape = 'u8[8192]{0}', space=vmem, size = 0x2000, scoped, tag = 'input window, operand 0']
    #allocation3 [shape = 's32[2]{0}', space=sflag, size = 0x8, scoped, tag = 'scoped memory for tpu_custom_call.1']
    #allocation4 [shape = 's32[2]{0}', space=sflag, size = 0x8, scoped, tag = 'scoped memory for tpu_custom_call.1']
    #allocation5 [shape = 'u8[8192]{0}', space=vmem, size = 0x2000, scoped, tag = 'output window, operand 0']
    %13 = vsyncpa [#allocation3], 0
    %s14 = scalar_lea.sflag [#allocation3], 1
    %15 = vsyncpa %s14, 0
    %16 = vsyncpa [#allocation4], 0
    %s17 = scalar_lea.sflag [#allocation4], 1
    %18 = vsyncpa %s17, 0
    loop: start=0, step=1, limit=5
    $region2: #{tpu_custom_call.1} parent=1 // loop_pre_header
      _
    $region3: #{tpu_custom_call.1} parent=1 // loop_header
      %s20 = sphi 0, %s24
      %p21 = scmp.ge.s32.totalorder %s20, 5
      %s30 = sphi 0, %s32
      %s33 = sphi 0, %s30
      %s34 = sphi 0, %s33
      %s50 = sphi 0, %s34
      %s54 = sphi 0, %s54
      %s56 = sphi 0, %s54
      %s57 = sphi 0, %s56
      %s71 = sphi 0, %s57
      %s75 = sphi 0, %s75
      %s77 = sphi 0, %s75
      %s78 = sphi 0, %s77
      %s92 = sphi 0, %s78
      %s96 = sphi 0, %s96
      %s98 = sphi 0, %s96
      %s99 = sphi 0, %s98
      %s113 = sphi 0, %s99
      %s117 = sphi 0, %s117
      %s119 = sphi 0, %s117
      %s120 = sphi 0, %s119
      %s134 = sphi 0, %s120
      %s138 = sphi 0, %s138
      %s140 = sphi 0, %s138
      %s141 = sphi 0, %s140
      %s155 = sphi 0, %s141
      %s159 = sphi 0, %s159
      %s161 = sphi 0, %s159
      %s162 = sphi 0, %s161
      %s176 = sphi 0, %s162
      %s180 = sphi 0, %s180
      %s182 = sphi 0, %s180
      %s183 = sphi 0, %s182
      %s197 = sphi 0, %s183
      %s203 = sphi 0, %s205
      %s206 = sphi 0, %s203
      %s207 = sphi 0, %s206
      %s223 = sphi 0, %s207
    $region4: #{tpu_custom_call.1} parent=1 // loop_header_branch
      %23 = sbr.rel (%p21) target = $region8
    $region5: #{tpu_custom_call.1} parent=1 // loop_body
      %s25 = ssub.s32 %s20, 1
      %s26 = ssub.s32 %s20, 2
      %s27 = sadd.s32 %s20, 1
      %s28 = ssub.s32 %s20, %s27
      %p29 = scmp.eq.s32.totalorder %s28, 0
      %s31 = sadd.s32 %s30, 1
      %s32 = scalar_select %p29, %s30, %s31
      %p35 = pneg %p29
      %p36 = scmp.eq.s32.totalorder %s20, 2
      %p37 = por %p35, %p36
      %p38 = scmp.ne.s32.totalorder %s30, %s33
      %p39 = scmp.eq.s32.totalorder %s20, 0
      %p40 = por %p38, %p39
      %p41 = scmp.ne.s32.totalorder %s30, %s33
      %p42 = scmp.eq.s32.totalorder %s25, 2
      %p43 = por %p41, %p42
      %p44 = scmp.ne.s32.totalorder %s33, %s34
      %p45 = scmp.eq.s32.totalorder %s25, 0
      %p46 = por %p44, %p45
      %p47 = scmp.ne.s32.totalorder %s33, %s34
      %p48 = scmp.eq.s32.totalorder %s26, 2
      %p49 = por %p47, %p48
      %p51 = scmp.ne.s32.totalorder %s34, %s50
      %p52 = scmp.eq.s32.totalorder %s26, 0
      %p53 = por %p51, %p52
      %s55 = sadd.s32 %s54, 1
      %p58 = scmp.eq.s32.totalorder %s20, 2
      %p59 = scmp.ne.s32.totalorder %s54, %s56
      %p60 = scmp.eq.s32.totalorder %s20, 0
      %p61 = por %p59, %p60
      %p62 = scmp.ne.s32.totalorder %s54, %s56
      %p63 = scmp.eq.s32.totalorder %s25, 2
      %p64 = por %p62, %p63
      %p65 = scmp.ne.s32.totalorder %s56, %s57
      %p66 = scmp.eq.s32.totalorder %s25, 0
      %p67 = por %p65, %p66
      %p68 = scmp.ne.s32.totalorder %s56, %s57
      %p69 = scmp.eq.s32.totalorder %s26, 2
      %p70 = por %p68, %p69
      %p72 = scmp.ne.s32.totalorder %s57, %s71
      %p73 = scmp.eq.s32.totalorder %s26, 0
      %p74 = por %p72, %p73
      %s76 = sadd.s32 %s75, 1
      %p79 = scmp.eq.s32.totalorder %s20, 2
      %p80 = scmp.ne.s32.totalorder %s75, %s77
      %p81 = scmp.eq.s32.totalorder %s20, 0
      %p82 = por %p80, %p81
      %p83 = scmp.ne.s32.totalorder %s75, %s77
      %p84 = scmp.eq.s32.totalorder %s25, 2
      %p85 = por %p83, %p84
      %p86 = scmp.ne.s32.totalorder %s77, %s78
      %p87 = scmp.eq.s32.totalorder %s25, 0
      %p88 = por %p86, %p87
      %p89 = scmp.ne.s32.totalorder %s77, %s78
      %p90 = scmp.eq.s32.totalorder %s26, 2
      %p91 = por %p89, %p90
      %p93 = scmp.ne.s32.totalorder %s78, %s92
      %p94 = scmp.eq.s32.totalorder %s26, 0
      %p95 = por %p93, %p94
      %s97 = sadd.s32 %s96, 1
      %p100 = scmp.eq.s32.totalorder %s20, 2
      %p101 = scmp.ne.s32.totalorder %s96, %s98
      %p102 = scmp.eq.s32.totalorder %s20, 0
      %p103 = por %p101, %p102
      %p104 = scmp.ne.s32.totalorder %s96, %s98
      %p105 = scmp.eq.s32.totalorder %s25, 2
      %p106 = por %p104, %p105
      %p107 = scmp.ne.s32.totalorder %s98, %s99
      %p108 = scmp.eq.s32.totalorder %s25, 0
      %p109 = por %p107, %p108
      %p110 = scmp.ne.s32.totalorder %s98, %s99
      %p111 = scmp.eq.s32.totalorder %s26, 2
      %p112 = por %p110, %p111
      %p114 = scmp.ne.s32.totalorder %s99, %s113
      %p115 = scmp.eq.s32.totalorder %s26, 0
      %p116 = por %p114, %p115
      %s118 = sadd.s32 %s117, 1
      %p121 = scmp.eq.s32.totalorder %s20, 2
      %p122 = scmp.ne.s32.totalorder %s117, %s119
      %p123 = scmp.eq.s32.totalorder %s20, 0
      %p124 = por %p122, %p123
      %p125 = scmp.ne.s32.totalorder %s117, %s119
      %p126 = scmp.eq.s32.totalorder %s25, 2
      %p127 = por %p125, %p126
      %p128 = scmp.ne.s32.totalorder %s119, %s120
      %p129 = scmp.eq.s32.totalorder %s25, 0
      %p130 = por %p128, %p129
      %p131 = scmp.ne.s32.totalorder %s119, %s120
      %p132 = scmp.eq.s32.totalorder %s26, 2
      %p133 = por %p131, %p132
      %p135 = scmp.ne.s32.totalorder %s120, %s134
      %p136 = scmp.eq.s32.totalorder %s26, 0
      %p137 = por %p135, %p136
      %s139 = sadd.s32 %s138, 1
      %p142 = scmp.eq.s32.totalorder %s20, 2
      %p143 = scmp.ne.s32.totalorder %s138, %s140
      %p144 = scmp.eq.s32.totalorder %s20, 0
      %p145 = por %p143, %p144
      %p146 = scmp.ne.s32.totalorder %s138, %s140
      %p147 = scmp.eq.s32.totalorder %s25, 2
      %p148 = por %p146, %p147
      %p149 = scmp.ne.s32.totalorder %s140, %s141
      %p150 = scmp.eq.s32.totalorder %s25, 0
      %p151 = por %p149, %p150
      %p152 = scmp.ne.s32.totalorder %s140, %s141
      %p153 = scmp.eq.s32.totalorder %s26, 2
      %p154 = por %p152, %p153
      %p156 = scmp.ne.s32.totalorder %s141, %s155
      %p157 = scmp.eq.s32.totalorder %s26, 0
      %p158 = por %p156, %p157
      %s160 = sadd.s32 %s159, 1
      %p163 = scmp.eq.s32.totalorder %s20, 2
      %p164 = scmp.ne.s32.totalorder %s159, %s161
      %p165 = scmp.eq.s32.totalorder %s20, 0
      %p166 = por %p164, %p165
      %p167 = scmp.ne.s32.totalorder %s159, %s161
      %p168 = scmp.eq.s32.totalorder %s25, 2
      %p169 = por %p167, %p168
      %p170 = scmp.ne.s32.totalorder %s161, %s162
      %p171 = scmp.eq.s32.totalorder %s25, 0
      %p172 = por %p170, %p171
      %p173 = scmp.ne.s32.totalorder %s161, %s162
      %p174 = scmp.eq.s32.totalorder %s26, 2
      %p175 = por %p173, %p174
      %p177 = scmp.ne.s32.totalorder %s162, %s176
      %p178 = scmp.eq.s32.totalorder %s26, 0
      %p179 = por %p177, %p178
      %s181 = sadd.s32 %s180, 1
      %p184 = scmp.eq.s32.totalorder %s20, 2
      %p185 = scmp.ne.s32.totalorder %s180, %s182
      %p186 = scmp.eq.s32.totalorder %s20, 0
      %p187 = por %p185, %p186
      %p188 = scmp.ne.s32.totalorder %s180, %s182
      %p189 = scmp.eq.s32.totalorder %s25, 2
      %p190 = por %p188, %p189
      %p191 = scmp.ne.s32.totalorder %s182, %s183
      %p192 = scmp.eq.s32.totalorder %s25, 0
      %p193 = por %p191, %p192
      %p194 = scmp.ne.s32.totalorder %s182, %s183
      %p195 = scmp.eq.s32.totalorder %s26, 2
      %p196 = por %p194, %p195
      %p198 = scmp.ne.s32.totalorder %s183, %s197
      %p199 = scmp.eq.s32.totalorder %s26, 0
      %p200 = por %p198, %p199
      %s201 = ssub.s32 %s20, %s27
      %p202 = scmp.eq.s32.totalorder %s201, 0
      %s204 = sadd.s32 %s203, 1
      %s205 = scalar_select %p202, %s203, %s204
      %p208 = pneg %p202
      %p209 = scmp.eq.s32.totalorder %s20, 2
      %p210 = por %p208, %p209
      %p211 = scmp.ne.s32.totalorder %s203, %s206
      %p212 = scmp.eq.s32.totalorder %s20, 0
      %p213 = por %p211, %p212
      %p214 = scmp.ne.s32.totalorder %s203, %s206
      %p215 = scmp.eq.s32.totalorder %s25, 2
      %p216 = por %p214, %p215
      %p217 = scmp.ne.s32.totalorder %s206, %s207
      %p218 = scmp.eq.s32.totalorder %s25, 0
      %p219 = por %p217, %p218
      %p220 = scmp.ne.s32.totalorder %s206, %s207
      %p221 = scmp.eq.s32.totalorder %s26, 2
      %p222 = por %p220, %p221
      %p224 = scmp.ne.s32.totalorder %s207, %s223
      %p225 = scmp.eq.s32.totalorder %s26, 0
      %p226 = por %p224, %p225
      %p227 = scmp.le.s32.totalorder 1, %s20
      %p228 = scmp.lt.s32.totalorder %s20, 4
      %p229 = pnand %p227, %p228
      %p230 = pneg %p229
      // Predicated region
      $region9: #{tpu_custom_call.1} parent=5 // pred_check
        _
      $region10: #{tpu_custom_call.1} parent=5 // pred_check_branch
        %232 = sbr.rel (%p229) target = $region12
      $region11: #{tpu_custom_call.1} parent=5 // pred_region
        %s233 = ssub.s32 %s20, 1
        // Predicated region
        $region13: #{tpu_custom_call.1} parent=11 // pred_check
          %p234 = pneg %p67
        $region14: #{tpu_custom_call.1} parent=11 // pred_check_branch
          %236 = sbr.rel (%p234) target = $region16
        $region15: #{tpu_custom_call.1} parent=11 // pred_region
          _
        $region16: #{tpu_custom_call.1} parent=11 // pred_fallthru
          _
        // Predicated region
        $region17: #{tpu_custom_call.1} parent=11 // pred_check
          %p237 = pneg %p88
        $region18: #{tpu_custom_call.1} parent=11 // pred_check_branch
          %239 = sbr.rel (%p237) target = $region20
        $region19: #{tpu_custom_call.1} parent=11 // pred_region
          _
        $region20: #{tpu_custom_call.1} parent=11 // pred_fallthru
          _
        // Predicated region
        $region21: #{tpu_custom_call.1} parent=11 // pred_check
          %p240 = pneg %p109
        $region22: #{tpu_custom_call.1} parent=11 // pred_check_branch
          %242 = sbr.rel (%p240) target = $region24
        $region23: #{tpu_custom_call.1} parent=11 // pred_region
          _
        $region24: #{tpu_custom_call.1} parent=11 // pred_fallthru
          _
        // Predicated region
        $region25: #{tpu_custom_call.1} parent=11 // pred_check
          %p243 = pneg %p130
        $region26: #{tpu_custom_call.1} parent=11 // pred_check_branch
          %245 = sbr.rel (%p243) target = $region28
        $region27: #{tpu_custom_call.1} parent=11 // pred_region
          _
        $region28: #{tpu_custom_call.1} parent=11 // pred_fallthru
          _
        // Predicated region
        $region29: #{tpu_custom_call.1} parent=11 // pred_check
          %p246 = pneg %p151
        $region30: #{tpu_custom_call.1} parent=11 // pred_check_branch
          %248 = sbr.rel (%p246) target = $region32
        $region31: #{tpu_custom_call.1} parent=11 // pred_region
          _
        $region32: #{tpu_custom_call.1} parent=11 // pred_fallthru
          _
        // Predicated region
        $region33: #{tpu_custom_call.1} parent=11 // pred_check
          %p249 = pneg %p172
        $region34: #{tpu_custom_call.1} parent=11 // pred_check_branch
          %251 = sbr.rel (%p249) target = $region36
        $region35: #{tpu_custom_call.1} parent=11 // pred_region
          _
        $region36: #{tpu_custom_call.1} parent=11 // pred_fallthru
          _
        // Predicated region
        $region37: #{tpu_custom_call.1} parent=11 // pred_check
          %p252 = pneg %p193
        $region38: #{tpu_custom_call.1} parent=11 // pred_check_branch
          %254 = sbr.rel (%p252) target = $region40
        $region39: #{tpu_custom_call.1} parent=11 // pred_region
          _
        $region40: #{tpu_custom_call.1} parent=11 // pred_fallthru
          _
      $region12: #{tpu_custom_call.1} parent=5 // pred_fallthru
        _
      %p255 = scmp.lt.s32.totalorder %s20, 3
      // Predicated region
      $region41: #{tpu_custom_call.1} parent=5 // pred_check
        %p256 = pneg %p255
      $region42: #{tpu_custom_call.1} parent=5 // pred_check_branch
        %258 = sbr.rel (%p256) target = $region44
      $region43: #{tpu_custom_call.1} parent=5 // pred_region
        // Predicated region
        $region45: #{tpu_custom_call.1} parent=43 // pred_check
          %p259 = pneg %p40
        $region46: #{tpu_custom_call.1} parent=43 // pred_check_branch
          %261 = sbr.rel (%p259) target = $region48
        $region47: #{tpu_custom_call.1} parent=43 // pred_region
          %s262 = sand.u32 %s30, 1
          %s263 = scalar_lea.sflag [#allocation3], %s262
          %s264 = sand.u32 %s30, 1
          %s265 = smul.addr %s264, 8
          %s266 = scalar_lea.vmem [#allocation2], %s265
          %s268 = ssub.s32 128, 128
          %269 = vsyncadd %s263, %s268
          %s270 = smul.addr %s20, 128
          %s271 = scalar_lea.hbm %s0, %s270
          %s273 = sshll.u32 %s266, 4
          %s274 = int_to_ptr.vmem [resolvable:$true] %s273
          %276 = dma.hbm_to_vmem [thread:$0]  %s271, 128, %s274, %s263
        $region48: #{tpu_custom_call.1} parent=43 // pred_fallthru
          _
      $region44: #{tpu_custom_call.1} parent=5 // pred_fallthru
        _
      %p277 = scmp.le.s32.totalorder 1, %s20
      %p278 = scmp.lt.s32.totalorder %s20, 4
      %p279 = pnand %p277, %p278
      %p280 = pneg %p279
      // Predicated region
      $region49: #{tpu_custom_call.1} parent=5 // pred_check
        _
      $region50: #{tpu_custom_call.1} parent=5 // pred_check_branch
        %282 = sbr.rel (%p279) target = $region52
      $region51: #{tpu_custom_call.1} parent=5 // pred_region
        %s283 = ssub.s32 %s20, 1
        %s284 = sand.u32 %s33, 1
        %s285 = scalar_lea.sflag [#allocation3], %s284
        %s286 = sand.u32 %s33, 1
        %s287 = smul.addr %s286, 8
        %s288 = scalar_lea.vmem [#allocation2], %s287
        // Predicated region
        $region53: #{tpu_custom_call.1} parent=51 // pred_check
          %p289 = pneg %p46
        $region54: #{tpu_custom_call.1} parent=51 // pred_check_branch
          %291 = sbr.rel (%p289) target = $region56
        $region55: #{tpu_custom_call.1} parent=51 // pred_region
          %292 = dma.done %s285, 128
        $region56: #{tpu_custom_call.1} parent=51 // pred_fallthru
          _
        %s293 = sand.u32 %s33, 1
        %s294 = scalar_lea.sflag [#allocation3], %s293
        %s295 = sand.u32 %s33, 1
        %s296 = smul.addr %s295, 8
        %s297 = scalar_lea.vmem [#allocation2], %s296
        %p298 = pneg %p46
        %p299 = pneg %p43
        %p300 = pneg %p67
        %p301 = pneg %p64
        %p302 = pneg %p88
        %p303 = pneg %p85
        %p304 = pneg %p109
        %p305 = pneg %p106
        %p306 = pneg %p130
        %p307 = pneg %p127
        %p308 = pneg %p151
        %p309 = pneg %p148
        %p310 = pneg %p172
        %p311 = pneg %p169
        %p312 = pneg %p193
        %p313 = pneg %p190
        %p314 = pneg %p219
        %p315 = pneg %p216
        %s316 = sand.u32 %s206, 1
        %s317 = scalar_lea.sflag [#allocation4], %s316
        %s318 = sand.u32 %s206, 1
        %s319 = smul.addr %s318, 8
        %s320 = scalar_lea.vmem [#allocation5], %s319
        %v322 = vld [vmem:[%s288] sm:$0xff]
        %v323 = vld [vmem:[%s1] sm:$0xff]
        %v324 = vld [vmem:[%s1 + $0x8] sm:$0xff]
        %v325 = vld [vmem:[%s1 + $0x10] sm:$0xff]
        %v326 = vld [vmem:[%s1 + $0x18] sm:$0xff]
        %vm327 = vcmask 261120
        %v329 = vsel %vm327, %v322, 0
        %331 = vmatprep.subr.mxu0 0.0
        %332 = vmatpush1.msra.mxu0 0.0
        %333 = vmatprep.subr.mxu0 0.0
        %334 = vmatpush1.msra.mxu0 0.0
        %335 = vmatprep.subr.mxu0 0.0
        %336 = vmatpush1.msra.mxu0 0.0
        %337 = vmatprep.subr.mxu0 0.0
        %338 = vmatpush1.msra.mxu0 0.0
        %339 = vmatprep.subr.mxu0 0.0
        %340 = vmatpush1.msra.mxu0 0.0
        %341 = vmatprep.subr.mxu0 0.0
        %342 = vmatpush1.msra.mxu0 0.0
        %343 = vmatprep.subr.mxu0 0.0
        %344 = vmatpush1.msra.mxu0 0.0
        %345 = vmatprep.subr.mxu0 0.0
        %346 = vmatpush1.msra.mxu0 0.0
        %347 = vmatprep.subr.mxu0 0.0
        %348 = vmatpush1.msra.mxu0 0.0
        %349 = vmatprep.subr.mxu0 0.0
        %350 = vmatpush1.msra.mxu0 0.0
        %351 = vmatprep.subr.mxu0 0.0
        %352 = vmatpush1.msra.mxu0 0.0
        %353 = vmatprep.subr.mxu0 0.0
        %354 = vmatpush1.msra.mxu0 0.0
        %355 = vmatprep.subr.mxu0 0.0
        %v356 = vand.u32 %v326, 4294901760
        %357 = vmatpush1.msra.mxu0 %v356
        %358 = vmatprep.subr.mxu0 0.0
        %v359 = vand.u32 %v325, 4294901760
        %360 = vmatpush1.msra.mxu0 %v359
        %361 = vmatprep.subr.mxu0 0.0
        %v362 = vand.u32 %v324, 4294901760
        %363 = vmatpush1.msra.mxu0 %v362
        %364 = vmatprep.subr.mxu0 0.0
        %v365 = vand.u32 %v323, 4294901760
        %366 = vmatpush1.msra.mxu0 %v365
        %367 = vmatprep.subr.mxu0 0.0
        %368 = vmatpush2.msra.mxu0 0.0
        %369 = vmatprep.subr.mxu0 0.0
        %370 = vmatpush2.msra.mxu0 0.0
        %371 = vmatprep.subr.mxu0 0.0
        %372 = vmatpush2.msra.mxu0 0.0
        %373 = vmatprep.subr.mxu0 0.0
        %374 = vmatpush2.msra.mxu0 0.0
        %375 = vmatprep.subr.mxu0 0.0
        %376 = vmatpush2.msra.mxu0 0.0
        %377 = vmatprep.subr.mxu0 0.0
        %378 = vmatpush2.msra.mxu0 0.0
        %379 = vmatprep.subr.mxu0 0.0
        %380 = vmatpush2.msra.mxu0 0.0
        %381 = vmatprep.subr.mxu0 0.0
        %382 = vmatpush2.msra.mxu0 0.0
        %383 = vmatprep.subr.mxu0 0.0
        %384 = vmatpush2.msra.mxu0 0.0
        %385 = vmatprep.subr.mxu0 0.0
        %386 = vmatpush2.msra.mxu0 0.0
        %387 = vmatprep.subr.mxu0 0.0
        %388 = vmatpush2.msra.mxu0 0.0
        %389 = vmatprep.subr.mxu0 0.0
        %390 = vmatpush2.msra.mxu0 0.0
        %391 = vmatprep.subr.mxu0 0.0
        %392 = vmatpush2.msra.mxu0 0.0
        %393 = vmatprep.subr.mxu0 0.0
        %394 = vmatpush2.msra.mxu0 0.0
        %395 = vmatprep.subr.mxu0 0.0
        %396 = vmatpush2.msra.mxu0 0.0
        %397 = vmatprep.subr.mxu0 0.0
        %398 = vmatpush2.msra.mxu0 0.0
        %399 = vmatprep.mubr.f32.mxu0 0.0
        %v400 = vand.u32 %v329, 4294901760
        %v401 = vsub.f32 %v329, %v400
        %v402 = vand.u32 %v401, 4294901760
        %v403 = vsub.f32 %v401, %v402
        %v404 = vand.u32 %v403, 4294901760
        %405 = vmatmul.mubr.f32.gmra.mxu0 %v404
        %v406 = vpop.f32.mrf.mxu0
        %v407 = vadd.f32 0.0, %v406
        %v408 = vpop.f32.mrf.mxu0
        %409 = vdwg.mxu0
        %410 = vmatprep.subr.mxu0 0.0
        %411 = vmatpush1.msra.mxu0 0.0
        %412 = vmatprep.subr.mxu0 0.0
        %413 = vmatpush1.msra.mxu0 0.0
        %414 = vmatprep.subr.mxu0 0.0
        %415 = vmatpush1.msra.mxu0 0.0
        %416 = vmatprep.subr.mxu0 0.0
        %417 = vmatpush1.msra.mxu0 0.0
        %418 = vmatprep.subr.mxu0 0.0
        %419 = vmatpush1.msra.mxu0 0.0
        %420 = vmatprep.subr.mxu0 0.0
        %421 = vmatpush1.msra.mxu0 0.0
        %422 = vmatprep.subr.mxu0 0.0
        %423 = vmatpush1.msra.mxu0 0.0
        %424 = vmatprep.subr.mxu0 0.0
        %425 = vmatpush1.msra.mxu0 0.0
        %426 = vmatprep.subr.mxu0 0.0
        %427 = vmatpush1.msra.mxu0 0.0
        %428 = vmatprep.subr.mxu0 0.0
        %429 = vmatpush1.msra.mxu0 0.0
        %430 = vmatprep.subr.mxu0 0.0
        %431 = vmatpush1.msra.mxu0 0.0
        %432 = vmatprep.subr.mxu0 0.0
        %433 = vmatpush1.msra.mxu0 0.0
        %434 = vmatprep.subr.mxu0 0.0
        %v435 = vand.u32 %v326, 4294901760
        %v436 = vsub.f32 %v326, %v435
        %v437 = vand.u32 %v436, 4294901760
        %v438 = vsub.f32 %v436, %v437
        %v439 = vand.u32 %v438, 4294901760
        %440 = vmatpush1.msra.mxu0 %v439
        %441 = vmatprep.subr.mxu0 0.0
        %v442 = vand.u32 %v325, 4294901760
        %v443 = vsub.f32 %v325, %v442
        %v444 = vand.u32 %v443, 4294901760
        %v445 = vsub.f32 %v443, %v444
        %v446 = vand.u32 %v445, 4294901760
        %447 = vmatpush1.msra.mxu0 %v446
        %448 = vmatprep.subr.mxu0 0.0
        %v449 = vand.u32 %v324, 4294901760
        %v450 = vsub.f32 %v324, %v449
        %v451 = vand.u32 %v450, 4294901760
        %v452 = vsub.f32 %v450, %v451
        %v453 = vand.u32 %v452, 4294901760
        %454 = vmatpush1.msra.mxu0 %v453
        %455 = vmatprep.subr.mxu0 0.0
        %v456 = vand.u32 %v323, 4294901760
        %v457 = vsub.f32 %v323, %v456
        %v458 = vand.u32 %v457, 4294901760
        %v459 = vsub.f32 %v457, %v458
        %v460 = vand.u32 %v459, 4294901760
        %461 = vmatpush1.msra.mxu0 %v460
        %462 = vmatprep.subr.mxu0 0.0
        %463 = vmatpush2.msra.mxu0 0.0
        %464 = vmatprep.subr.mxu0 0.0
        %465 = vmatpush2.msra.mxu0 0.0
        %466 = vmatprep.subr.mxu0 0.0
        %467 = vmatpush2.msra.mxu0 0.0
        %468 = vmatprep.subr.mxu0 0.0
        %469 = vmatpush2.msra.mxu0 0.0
        %470 = vmatprep.subr.mxu0 0.0
        %471 = vmatpush2.msra.mxu0 0.0
        %472 = vmatprep.subr.mxu0 0.0
        %473 = vmatpush2.msra.mxu0 0.0
        %474 = vmatprep.subr.mxu0 0.0
        %475 = vmatpush2.msra.mxu0 0.0
        %476 = vmatprep.subr.mxu0 0.0
        %477 = vmatpush2.msra.mxu0 0.0
        %478 = vmatprep.subr.mxu0 0.0
        %479 = vmatpush2.msra.mxu0 0.0
        %480 = vmatprep.subr.mxu0 0.0
        %481 = vmatpush2.msra.mxu0 0.0
        %482 = vmatprep.subr.mxu0 0.0
        %483 = vmatpush2.msra.mxu0 0.0
        %484 = vmatprep.subr.mxu0 0.0
        %485 = vmatpush2.msra.mxu0 0.0
        %486 = vmatprep.subr.mxu0 0.0
        %487 = vmatpush2.msra.mxu0 0.0
        %488 = vmatprep.subr.mxu0 0.0
        %489 = vmatpush2.msra.mxu0 0.0
        %490 = vmatprep.subr.mxu0 0.0
        %491 = vmatpush2.msra.mxu0 0.0
        %492 = vmatprep.subr.mxu0 0.0
        %493 = vmatpush2.msra.mxu0 0.0
        %494 = vmatprep.mubr.f32.mxu0 0.0
        %v495 = vand.u32 %v329, 4294901760
        %496 = vmatmul.mubr.f32.gmra.mxu0 %v495
        %v497 = vpop.f32.mrf.mxu0
        %v498 = vadd.f32 %v407, %v497
        %v499 = vpop.f32.mrf.mxu0
        %500 = vdwg.mxu0
        %501 = vmatprep.subr.mxu0 0.0
        %502 = vmatpush1.msra.mxu0 0.0
        %503 = vmatprep.subr.mxu0 0.0
        %504 = vmatpush1.msra.mxu0 0.0
        %505 = vmatprep.subr.mxu0 0.0
        %506 = vmatpush1.msra.mxu0 0.0
        %507 = vmatprep.subr.mxu0 0.0
        %508 = vmatpush1.msra.mxu0 0.0
        %509 = vmatprep.subr.mxu0 0.0
        %510 = vmatpush1.msra.mxu0 0.0
        %511 = vmatprep.subr.mxu0 0.0
        %512 = vmatpush1.msra.mxu0 0.0
        %513 = vmatprep.subr.mxu0 0.0
        %514 = vmatpush1.msra.mxu0 0.0
        %515 = vmatprep.subr.mxu0 0.0
        %516 = vmatpush1.msra.mxu0 0.0
        %517 = vmatprep.subr.mxu0 0.0
        %518 = vmatpush1.msra.mxu0 0.0
        %519 = vmatprep.subr.mxu0 0.0
        %520 = vmatpush1.msra.mxu0 0.0
        %521 = vmatprep.subr.mxu0 0.0
        %522 = vmatpush1.msra.mxu0 0.0
        %523 = vmatprep.subr.mxu0 0.0
        %524 = vmatpush1.msra.mxu0 0.0
        %525 = vmatprep.subr.mxu0 0.0
        %v526 = vand.u32 %v326, 4294901760
        %v527 = vsub.f32 %v326, %v526
        %528 = vmatpush1.msra.mxu0 %v527
        %529 = vmatprep.subr.mxu0 0.0
        %v530 = vand.u32 %v325, 4294901760
        %v531 = vsub.f32 %v325, %v530
        %532 = vmatpush1.msra.mxu0 %v531
        %533 = vmatprep.subr.mxu0 0.0
        %v534 = vand.u32 %v324, 4294901760
        %v535 = vsub.f32 %v324, %v534
        %536 = vmatpush1.msra.mxu0 %v535
        %537 = vmatprep.subr.mxu0 0.0
        %v538 = vand.u32 %v323, 4294901760
        %v539 = vsub.f32 %v323, %v538
        %540 = vmatpush1.msra.mxu0 %v539
        %541 = vmatprep.subr.mxu0 0.0
        %542 = vmatpush2.msra.mxu0 0.0
        %543 = vmatprep.subr.mxu0 0.0
        %544 = vmatpush2.msra.mxu0 0.0
        %545 = vmatprep.subr.mxu0 0.0
        %546 = vmatpush2.msra.mxu0 0.0
        %547 = vmatprep.subr.mxu0 0.0
        %548 = vmatpush2.msra.mxu0 0.0
        %549 = vmatprep.subr.mxu0 0.0
        %550 = vmatpush2.msra.mxu0 0.0
        %551 = vmatprep.subr.mxu0 0.0
        %552 = vmatpush2.msra.mxu0 0.0
        %553 = vmatprep.subr.mxu0 0.0
        %554 = vmatpush2.msra.mxu0 0.0
        %555 = vmatprep.subr.mxu0 0.0
        %556 = vmatpush2.msra.mxu0 0.0
        %557 = vmatprep.subr.mxu0 0.0
        %558 = vmatpush2.msra.mxu0 0.0
        %559 = vmatprep.subr.mxu0 0.0
        %560 = vmatpush2.msra.mxu0 0.0
        %561 = vmatprep.subr.mxu0 0.0
        %562 = vmatpush2.msra.mxu0 0.0
        %563 = vmatprep.subr.mxu0 0.0
        %564 = vmatpush2.msra.mxu0 0.0
        %565 = vmatprep.subr.mxu0 0.0
        %566 = vmatpush2.msra.mxu0 0.0
        %567 = vmatprep.subr.mxu0 0.0
        %568 = vmatpush2.msra.mxu0 0.0
        %569 = vmatprep.subr.mxu0 0.0
        %570 = vmatpush2.msra.mxu0 0.0
        %571 = vmatprep.subr.mxu0 0.0
        %572 = vmatpush2.msra.mxu0 0.0
        %573 = vmatprep.mubr.f32.mxu0 0.0
        %v574 = vand.u32 %v329, 4294901760
        %v575 = vsub.f32 %v329, %v574
        %576 = vmatmul.mubr.f32.gmra.mxu0 %v575
        %v577 = vpop.f32.mrf.mxu0
        %v578 = vadd.f32 %v498, %v577
        %v579 = vpop.f32.mrf.mxu0
        %580 = vdwg.mxu0
        %581 = vmatprep.subr.mxu0 0.0
        %582 = vmatpush1.msra.mxu0 0.0
        %583 = vmatprep.subr.mxu0 0.0
        %584 = vmatpush1.msra.mxu0 0.0
        %585 = vmatprep.subr.mxu0 0.0
        %586 = vmatpush1.msra.mxu0 0.0
        %587 = vmatprep.subr.mxu0 0.0
        %588 = vmatpush1.msra.mxu0 0.0
        %589 = vmatprep.subr.mxu0 0.0
        %590 = vmatpush1.msra.mxu0 0.0
        %591 = vmatprep.subr.mxu0 0.0
        %592 = vmatpush1.msra.mxu0 0.0
        %593 = vmatprep.subr.mxu0 0.0
        %594 = vmatpush1.msra.mxu0 0.0
        %595 = vmatprep.subr.mxu0 0.0
        %596 = vmatpush1.msra.mxu0 0.0
        %597 = vmatprep.subr.mxu0 0.0
        %598 = vmatpush1.msra.mxu0 0.0
        %599 = vmatprep.subr.mxu0 0.0
        %600 = vmatpush1.msra.mxu0 0.0
        %601 = vmatprep.subr.mxu0 0.0
        %602 = vmatpush1.msra.mxu0 0.0
        %603 = vmatprep.subr.mxu0 0.0
        %604 = vmatpush1.msra.mxu0 0.0
        %605 = vmatprep.subr.mxu0 0.0
        %v606 = vand.u32 %v326, 4294901760
        %607 = vmatpush1.msra.mxu0 %v606
        %608 = vmatprep.subr.mxu0 0.0
        %v609 = vand.u32 %v325, 4294901760
        %610 = vmatpush1.msra.mxu0 %v609
        %611 = vmatprep.subr.mxu0 0.0
        %v612 = vand.u32 %v324, 4294901760
        %613 = vmatpush1.msra.mxu0 %v612
        %614 = vmatprep.subr.mxu0 0.0
        %v615 = vand.u32 %v323, 4294901760
        %616 = vmatpush1.msra.mxu0 %v615
        %617 = vmatprep.subr.mxu0 0.0
        %618 = vmatpush2.msra.mxu0 0.0
        %619 = vmatprep.subr.mxu0 0.0
        %620 = vmatpush2.msra.mxu0 0.0
        %621 = vmatprep.subr.mxu0 0.0
        %622 = vmatpush2.msra.mxu0 0.0
        %623 = vmatprep.subr.mxu0 0.0
        %624 = vmatpush2.msra.mxu0 0.0
        %625 = vmatprep.subr.mxu0 0.0
        %626 = vmatpush2.msra.mxu0 0.0
        %627 = vmatprep.subr.mxu0 0.0
        %628 = vmatpush2.msra.mxu0 0.0
        %629 = vmatprep.subr.mxu0 0.0
        %630 = vmatpush2.msra.mxu0 0.0
        %631 = vmatprep.subr.mxu0 0.0
        %632 = vmatpush2.msra.mxu0 0.0
        %633 = vmatprep.subr.mxu0 0.0
        %634 = vmatpush2.msra.mxu0 0.0
        %635 = vmatprep.subr.mxu0 0.0
        %636 = vmatpush2.msra.mxu0 0.0
        %637 = vmatprep.subr.mxu0 0.0
        %638 = vmatpush2.msra.mxu0 0.0
        %639 = vmatprep.subr.mxu0 0.0
        %640 = vmatpush2.msra.mxu0 0.0
        %641 = vmatprep.subr.mxu0 0.0
        %642 = vmatpush2.msra.mxu0 0.0
        %643 = vmatprep.subr.mxu0 0.0
        %644 = vmatpush2.msra.mxu0 0.0
        %645 = vmatprep.subr.mxu0 0.0
        %646 = vmatpush2.msra.mxu0 0.0
        %647 = vmatprep.subr.mxu0 0.0
        %648 = vmatpush2.msra.mxu0 0.0
        %649 = vmatprep.mubr.f32.mxu0 0.0
        %v650 = vand.u32 %v329, 4294901760
        %v651 = vsub.f32 %v329, %v650
        %v652 = vand.u32 %v651, 4294901760
        %653 = vmatmul.mubr.f32.gmra.mxu0 %v652
        %v654 = vpop.f32.mrf.mxu0
        %v655 = vadd.f32 %v578, %v654
        %v656 = vpop.f32.mrf.mxu0
        %657 = vdwg.mxu0
        %658 = vmatprep.subr.mxu0 0.0
        %659 = vmatpush1.msra.mxu0 0.0
        %660 = vmatprep.subr.mxu0 0.0
        %661 = vmatpush1.msra.mxu0 0.0
        %662 = vmatprep.subr.mxu0 0.0
        %663 = vmatpush1.msra.mxu0 0.0
        %664 = vmatprep.subr.mxu0 0.0
        %665 = vmatpush1.msra.mxu0 0.0
        %666 = vmatprep.subr.mxu0 0.0
        %667 = vmatpush1.msra.mxu0 0.0
        %668 = vmatprep.subr.mxu0 0.0
        %669 = vmatpush1.msra.mxu0 0.0
        %670 = vmatprep.subr.mxu0 0.0
        %671 = vmatpush1.msra.mxu0 0.0
        %672 = vmatprep.subr.mxu0 0.0
        %673 = vmatpush1.msra.mxu0 0.0
        %674 = vmatprep.subr.mxu0 0.0
        %675 = vmatpush1.msra.mxu0 0.0
        %676 = vmatprep.subr.mxu0 0.0
        %677 = vmatpush1.msra.mxu0 0.0
        %678 = vmatprep.subr.mxu0 0.0
        %679 = vmatpush1.msra.mxu0 0.0
        %680 = vmatprep.subr.mxu0 0.0
        %681 = vmatpush1.msra.mxu0 0.0
        %682 = vmatprep.subr.mxu0 0.0
        %v683 = vand.u32 %v326, 4294901760
        %v684 = vsub.f32 %v326, %v683
        %v685 = vand.u32 %v684, 4294901760
        %686 = vmatpush1.msra.mxu0 %v685
        %687 = vmatprep.subr.mxu0 0.0
        %v688 = vand.u32 %v325, 4294901760
        %v689 = vsub.f32 %v325, %v688
        %v690 = vand.u32 %v689, 4294901760
        %691 = vmatpush1.msra.mxu0 %v690
        %692 = vmatprep.subr.mxu0 0.0
        %v693 = vand.u32 %v324, 4294901760
        %v694 = vsub.f32 %v324, %v693
        %v695 = vand.u32 %v694, 4294901760
        %696 = vmatpush1.msra.mxu0 %v695
        %697 = vmatprep.subr.mxu0 0.0
        %v698 = vand.u32 %v323, 4294901760
        %v699 = vsub.f32 %v323, %v698
        %v700 = vand.u32 %v699, 4294901760
        %701 = vmatpush1.msra.mxu0 %v700
        %702 = vmatprep.subr.mxu0 0.0
        %703 = vmatpush2.msra.mxu0 0.0
        %704 = vmatprep.subr.mxu0 0.0
        %705 = vmatpush2.msra.mxu0 0.0
        %706 = vmatprep.subr.mxu0 0.0
        %707 = vmatpush2.msra.mxu0 0.0
        %708 = vmatprep.subr.mxu0 0.0
        %709 = vmatpush2.msra.mxu0 0.0
        %710 = vmatprep.subr.mxu0 0.0
        %711 = vmatpush2.msra.mxu0 0.0
        %712 = vmatprep.subr.mxu0 0.0
        %713 = vmatpush2.msra.mxu0 0.0
        %714 = vmatprep.subr.mxu0 0.0
        %715 = vmatpush2.msra.mxu0 0.0
        %716 = vmatprep.subr.mxu0 0.0
        %717 = vmatpush2.msra.mxu0 0.0
        %718 = vmatprep.subr.mxu0 0.0
        %719 = vmatpush2.msra.mxu0 0.0
        %720 = vmatprep.subr.mxu0 0.0
        %721 = vmatpush2.msra.mxu0 0.0
        %722 = vmatprep.subr.mxu0 0.0
        %723 = vmatpush2.msra.mxu0 0.0
        %724 = vmatprep.subr.mxu0 0.0
        %725 = vmatpush2.msra.mxu0 0.0
        %726 = vmatprep.subr.mxu0 0.0
        %727 = vmatpush2.msra.mxu0 0.0
        %728 = vmatprep.subr.mxu0 0.0
        %729 = vmatpush2.msra.mxu0 0.0
        %730 = vmatprep.subr.mxu0 0.0
        %731 = vmatpush2.msra.mxu0 0.0
        %732 = vmatprep.subr.mxu0 0.0
        %733 = vmatpush2.msra.mxu0 0.0
        %734 = vmatprep.mubr.f32.mxu0 0.0
        %v735 = vand.u32 %v329, 4294901760
        %736 = vmatmul.mubr.f32.gmra.mxu0 %v735
        %v737 = vpop.f32.mrf.mxu0
        %v738 = vadd.f32 %v655, %v737
        %v739 = vpop.f32.mrf.mxu0
        %740 = vdwg.mxu0
        %741 = vmatprep.subr.mxu0 0.0
        %742 = vmatpush1.msra.mxu0 0.0
        %743 = vmatprep.subr.mxu0 0.0
        %744 = vmatpush1.msra.mxu0 0.0
        %745 = vmatprep.subr.mxu0 0.0
        %746 = vmatpush1.msra.mxu0 0.0
        %747 = vmatprep.subr.mxu0 0.0
        %748 = vmatpush1.msra.mxu0 0.0
        %749 = vmatprep.subr.mxu0 0.0
        %750 = vmatpush1.msra.mxu0 0.0
        %751 = vmatprep.subr.mxu0 0.0
        %752 = vmatpush1.msra.mxu0 0.0
        %753 = vmatprep.subr.mxu0 0.0
        %754 = vmatpush1.msra.mxu0 0.0
        %755 = vmatprep.subr.mxu0 0.0
        %756 = vmatpush1.msra.mxu0 0.0
        %757 = vmatprep.subr.mxu0 0.0
        %758 = vmatpush1.msra.mxu0 0.0
        %759 = vmatprep.subr.mxu0 0.0
        %760 = vmatpush1.msra.mxu0 0.0
        %761 = vmatprep.subr.mxu0 0.0
        %762 = vmatpush1.msra.mxu0 0.0
        %763 = vmatprep.subr.mxu0 0.0
        %764 = vmatpush1.msra.mxu0 0.0
        %765 = vmatprep.subr.mxu0 0.0
        %v766 = vand.u32 %v326, 4294901760
        %767 = vmatpush1.msra.mxu0 %v766
        %768 = vmatprep.subr.mxu0 0.0
        %v769 = vand.u32 %v325, 4294901760
        %770 = vmatpush1.msra.mxu0 %v769
        %771 = vmatprep.subr.mxu0 0.0
        %v772 = vand.u32 %v324, 4294901760
        %773 = vmatpush1.msra.mxu0 %v772
        %774 = vmatprep.subr.mxu0 0.0
        %v775 = vand.u32 %v323, 4294901760
        %776 = vmatpush1.msra.mxu0 %v775
        %777 = vmatprep.subr.mxu0 0.0
        %778 = vmatpush2.msra.mxu0 0.0
        %779 = vmatprep.subr.mxu0 0.0
        %780 = vmatpush2.msra.mxu0 0.0
        %781 = vmatprep.subr.mxu0 0.0
        %782 = vmatpush2.msra.mxu0 0.0
        %783 = vmatprep.subr.mxu0 0.0
        %784 = vmatpush2.msra.mxu0 0.0
        %785 = vmatprep.subr.mxu0 0.0
        %786 = vmatpush2.msra.mxu0 0.0
        %787 = vmatprep.subr.mxu0 0.0
        %788 = vmatpush2.msra.mxu0 0.0
        %789 = vmatprep.subr.mxu0 0.0
        %790 = vmatpush2.msra.mxu0 0.0
        %791 = vmatprep.subr.mxu0 0.0
        %792 = vmatpush2.msra.mxu0 0.0
        %793 = vmatprep.subr.mxu0 0.0
        %794 = vmatpush2.msra.mxu0 0.0
        %795 = vmatprep.subr.mxu0 0.0
        %796 = vmatpush2.msra.mxu0 0.0
        %797 = vmatprep.subr.mxu0 0.0
        %798 = vmatpush2.msra.mxu0 0.0
        %799 = vmatprep.subr.mxu0 0.0
        %800 = vmatpush2.msra.mxu0 0.0
        %801 = vmatprep.subr.mxu0 0.0
        %802 = vmatpush2.msra.mxu0 0.0
        %803 = vmatprep.subr.mxu0 0.0
        %804 = vmatpush2.msra.mxu0 0.0
        %805 = vmatprep.subr.mxu0 0.0
        %806 = vmatpush2.msra.mxu0 0.0
        %807 = vmatprep.subr.mxu0 0.0
        %808 = vmatpush2.msra.mxu0 0.0
        %809 = vmatprep.mubr.f32.mxu0 0.0
        %v810 = vand.u32 %v329, 4294901760
        %811 = vmatmul.mubr.f32.gmra.mxu0 %v810
        %v812 = vpop.f32.mrf.mxu0
        %v813 = vadd.f32 %v738, %v812
        %v814 = vpop.f32.mrf.mxu0
        %815 = vdwg.mxu0
        %v816 = vld [vmem:[%s2] sm:$0x1]
        %v818 = vlaneseq
        %v819 = vshrl.u32 %v818, 7
        %v820 = vsub.s32 0, %v819
        %v821 = vrot.slane %v816, %v820
        %vm823 = vcmp.gt.f32.partialorder %v813, %v821
        %v824 = vsel %vm823, 1, 0
        %v825 = vcvt.s32.f32 %v824
        %v826 = vpack.c.bf16 %v825, %v825
        %v827 = vld [vmem:[%s3] sm:$0xf]
        %v828 = vld [vmem:[%s3 + $0x4] sm:$0xf]
        %v829 = vld [vmem:[%s3 + $0x8] sm:$0xf]
        %v833 = vunpack.c.l.b16 %v827
        %v834 = vunpack.c.l.b16 %v828
        %v835 = vunpack.c.l.b16 %v829
        %v836 = vpack.c.b16 %v834, %v833
        %v837 = vpack.c.b16 %v835, %v835
        %vm839 = vcmask 195584
        %v841 = vsel %vm839, %v826, 0
        %vm843 = vcmask 1043456
        %v845 = vsel %vm843, %v837, 0
        %847 = vmatprep.subr.bf16.mxu0 0
        %848 = vmatpush1.bf16.msra.mxu0 0
        %849 = vmatprep.subr.bf16.mxu0 0
        %850 = vmatpush1.bf16.msra.mxu0 0
        %851 = vmatprep.subr.bf16.mxu0 0
        %852 = vmatpush1.bf16.msra.mxu0 0
        %853 = vmatprep.subr.bf16.mxu0 0
        %854 = vmatpush1.bf16.msra.mxu0 0
        %855 = vmatprep.subr.bf16.mxu0 0
        %856 = vmatpush1.bf16.msra.mxu0 0
        %857 = vmatprep.subr.bf16.mxu0 0
        %858 = vmatpush1.bf16.msra.mxu0 0
        %859 = vmatprep.subr.bf16.mxu0 0
        %860 = vmatpush1.bf16.msra.mxu0 %v845
        %861 = vmatprep.subr.bf16.mxu0 0
        %862 = vmatpush1.bf16.msra.mxu0 %v836
        %863 = vmatprep.subr.bf16.mxu0 0
        %864 = vmatpush2.bf16.msra.mxu0 0
        %865 = vmatprep.subr.bf16.mxu0 0
        %866 = vmatpush2.bf16.msra.mxu0 0
        %867 = vmatprep.subr.bf16.mxu0 0
        %868 = vmatpush2.bf16.msra.mxu0 0
        %869 = vmatprep.subr.bf16.mxu0 0
        %870 = vmatpush2.bf16.msra.mxu0 0
        %871 = vmatprep.subr.bf16.mxu0 0
        %872 = vmatpush2.bf16.msra.mxu0 0
        %873 = vmatprep.subr.bf16.mxu0 0
        %874 = vmatpush2.bf16.msra.mxu0 0
        %875 = vmatprep.subr.bf16.mxu0 0
        %876 = vmatpush2.bf16.msra.mxu0 0
        %877 = vmatprep.subr.bf16.mxu0 0
        %878 = vmatpush2.bf16.msra.mxu0 0
        %879 = vmatprep.mubr.bf16.mxu0 0
        %880 = vmatmul.mubr.bf16.gmra.mxu0 %v841
        %v881 = vpop.f32.mrf.mxu0
        %v882 = vadd.f32 0.0, %v881
        %v883 = vpop.f32.mrf.mxu0
        %v884 = vpop.f32.mrf.mxu0
        %v885 = vpop.f32.mrf.mxu0
        %886 = vdwg.mxu0
        %v887 = vpack.c.bf16 %v882, %v882
        %v888 = vld [vmem:[%s4] sm:$0xf]
        %vm889 = vcmask 64512
        %v891 = vsel %vm889, %v887, 0
        %v894 = vsel %vm843, %v888, 0
        %896 = vmatprep.subr.bf16.mxu0 0
        %897 = vmatpush1.bf16.msra.mxu0 0
        %898 = vmatprep.subr.bf16.mxu0 0
        %899 = vmatpush1.bf16.msra.mxu0 0
        %900 = vmatprep.subr.bf16.mxu0 0
        %901 = vmatpush1.bf16.msra.mxu0 0
        %902 = vmatprep.subr.bf16.mxu0 0
        %903 = vmatpush1.bf16.msra.mxu0 0
        %904 = vmatprep.subr.bf16.mxu0 0
        %905 = vmatpush1.bf16.msra.mxu0 0
        %906 = vmatprep.subr.bf16.mxu0 0
        %907 = vmatpush1.bf16.msra.mxu0 0
        %908 = vmatprep.subr.bf16.mxu0 0
        %909 = vmatpush1.bf16.msra.mxu0 0
        %910 = vmatprep.subr.bf16.mxu0 0
        %911 = vmatpush1.bf16.msra.mxu0 %v894
        %912 = vmatprep.subr.bf16.mxu0 0
        %913 = vmatpush2.bf16.msra.mxu0 0
        %914 = vmatprep.subr.bf16.mxu0 0
        %915 = vmatpush2.bf16.msra.mxu0 0
        %916 = vmatprep.subr.bf16.mxu0 0
        %917 = vmatpush2.bf16.msra.mxu0 0
        %918 = vmatprep.subr.bf16.mxu0 0
        %919 = vmatpush2.bf16.msra.mxu0 0
        %920 = vmatprep.subr.bf16.mxu0 0
        %921 = vmatpush2.bf16.msra.mxu0 0
        %922 = vmatprep.subr.bf16.mxu0 0
        %923 = vmatpush2.bf16.msra.mxu0 0
        %924 = vmatprep.subr.bf16.mxu0 0
        %925 = vmatpush2.bf16.msra.mxu0 0
        %926 = vmatprep.subr.bf16.mxu0 0
        %927 = vmatpush2.bf16.msra.mxu0 0
        %928 = vmatprep.mubr.bf16.mxu0 0
        %929 = vmatmul.mubr.bf16.gmra.mxu0 %v891
        %v930 = vpop.f32.mrf.mxu0
        %v931 = vadd.f32 0.5, %v930
        %v932 = vpop.f32.mrf.mxu0
        %v933 = vpop.f32.mrf.mxu0
        %v934 = vpop.f32.mrf.mxu0
        %935 = vdwg.mxu0
        %v936 = vcvt.f32.s32.to.zero.pseudo %v931
        %v937 = vld [vmem:[%s5] sm:$0x1]
        %v938 = vlaneseq
        %v939 = vshrl.u32 %v938, 7
        %v940 = vsub.s32 0, %v939
        %v941 = vrot.slane %v937, %v940
        %vm942 = vcmp.eq.s32.totalorder %v936, %v941
        %v943 = vsel %vm942, 1, 0
        %v944 = vcvt.s32.f32 %v943
        %v945 = vpack.c.bf16 %v944, %v944
        %v946 = vld [vmem:[%s6] sm:$0xf]
        %v947 = vld [vmem:[%s6 + $0x4] sm:$0xf]
        %v948 = vld [vmem:[%s6 + $0x8] sm:$0xf]
        %v949 = vld [vmem:[%s6 + $0xc] sm:$0xf]
        %v950 = vld [vmem:[%s6 + $0x10] sm:$0xf]
        %v951 = vld [vmem:[%s6 + $0x14] sm:$0xf]
        %v952 = vld [vmem:[%s6 + $0x18] sm:$0xf]
        %v953 = vld [vmem:[%s6 + $0x1c] sm:$0xf]
        %v954 = vld [vmem:[%s7] sm:$0xf]
        %v955 = vld [vmem:[%s7 + $0x4] sm:$0xf]
        %v956 = vld [vmem:[%s7 + $0x8] sm:$0xf]
        %v957 = vld [vmem:[%s7 + $0xc] sm:$0xf]
        %v958 = vld [vmem:[%s7 + $0x10] sm:$0xf]
        %v959 = vld [vmem:[%s7 + $0x14] sm:$0xf]
        %v960 = vld [vmem:[%s7 + $0x18] sm:$0xf]
        %v961 = vld [vmem:[%s7 + $0x1c] sm:$0xf]
        %v970 = vunpack.c.l.b16 %v954
        %v971 = vunpack.c.l.b16 %v955
        %v972 = vunpack.c.l.b16 %v956
        %v973 = vunpack.c.l.b16 %v957
        %v974 = vunpack.c.l.b16 %v958
        %v975 = vunpack.c.l.b16 %v959
        %v976 = vunpack.c.l.b16 %v960
        %v977 = vunpack.c.l.b16 %v961
        %v978 = vpack.c.b16 %v971, %v970
        %v979 = vpack.c.b16 %v973, %v972
        %v980 = vpack.c.b16 %v975, %v974
        %v981 = vpack.c.b16 %v977, %v976
        %vm986 = vcmask 523264
        %v988 = vsel %vm986, %v945, 0
        %990 = vmatprep.subr.bf16.mxu0 0
        %991 = vmatpush1.bf16.msra.mxu0 0
        %992 = vmatprep.subr.bf16.mxu0 0
        %993 = vmatpush1.bf16.msra.mxu0 0
        %994 = vmatprep.subr.bf16.mxu0 0
        %995 = vmatpush1.bf16.msra.mxu0 0
        %996 = vmatprep.subr.bf16.mxu0 0
        %997 = vmatpush1.bf16.msra.mxu0 0
        %998 = vmatprep.subr.bf16.mxu0 0
        %999 = vmatpush1.bf16.msra.mxu0 %v981
        %1000 = vmatprep.subr.bf16.mxu0 0
        %1001 = vmatpush1.bf16.msra.mxu0 %v980
        %1002 = vmatprep.subr.bf16.mxu0 0
        %1003 = vmatpush1.bf16.msra.mxu0 %v979
        %1004 = vmatprep.subr.bf16.mxu0 0
        %1005 = vmatpush1.bf16.msra.mxu0 %v978
        %1006 = vmatprep.subr.bf16.mxu0 0
        %1007 = vmatpush2.bf16.msra.mxu0 0
        %1008 = vmatprep.subr.bf16.mxu0 0
        %1009 = vmatpush2.bf16.msra.mxu0 0
        %1010 = vmatprep.subr.bf16.mxu0 0
        %1011 = vmatpush2.bf16.msra.mxu0 0
        %1012 = vmatprep.subr.bf16.mxu0 0
        %1013 = vmatpush2.bf16.msra.mxu0 0
        %1014 = vmatprep.subr.bf16.mxu0 0
        %1015 = vmatpush2.bf16.msra.mxu0 0
        %1016 = vmatprep.subr.bf16.mxu0 0
        %1017 = vmatpush2.bf16.msra.mxu0 0
        %1018 = vmatprep.subr.bf16.mxu0 0
        %1019 = vmatpush2.bf16.msra.mxu0 0
        %1020 = vmatprep.subr.bf16.mxu0 0
        %1021 = vmatpush2.bf16.msra.mxu0 0
        %1022 = vmatprep.mubr.bf16.mxu0 0
        %1023 = vmatmul.mubr.bf16.gmra.mxu0 %v988
        %v1024 = vpop.f32.mrf.mxu0
        %v1025 = vadd.f32 0.0, %v1024
        %v1026 = vpop.f32.mrf.mxu0
        %v1027 = vpop.f32.mrf.mxu0
        %v1028 = vpop.f32.mrf.mxu0
        %1029 = vdwg.mxu0
        %v1038 = vunpack.c.l.b16 %v946
        %v1039 = vunpack.c.l.b16 %v947
        %v1040 = vunpack.c.l.b16 %v948
        %v1041 = vunpack.c.l.b16 %v949
        %v1042 = vunpack.c.l.b16 %v950
        %v1043 = vunpack.c.l.b16 %v951
        %v1044 = vunpack.c.l.b16 %v952
        %v1045 = vunpack.c.l.b16 %v953
        %v1046 = vpack.c.b16 %v1039, %v1038
        %v1047 = vpack.c.b16 %v1041, %v1040
        %v1048 = vpack.c.b16 %v1043, %v1042
        %v1049 = vpack.c.b16 %v1045, %v1044
        %1054 = vmatprep.subr.bf16.mxu0 0
        %1055 = vmatpush1.bf16.msra.mxu0 0
        %1056 = vmatprep.subr.bf16.mxu0 0
        %1057 = vmatpush1.bf16.msra.mxu0 0
        %1058 = vmatprep.subr.bf16.mxu0 0
        %1059 = vmatpush1.bf16.msra.mxu0 0
        %1060 = vmatprep.subr.bf16.mxu0 0
        %1061 = vmatpush1.bf16.msra.mxu0 0
        %1062 = vmatprep.subr.bf16.mxu0 0
        %1063 = vmatpush1.bf16.msra.mxu0 %v1049
        %1064 = vmatprep.subr.bf16.mxu0 0
        %1065 = vmatpush1.bf16.msra.mxu0 %v1048
        %1066 = vmatprep.subr.bf16.mxu0 0
        %1067 = vmatpush1.bf16.msra.mxu0 %v1047
        %1068 = vmatprep.subr.bf16.mxu0 0
        %1069 = vmatpush1.bf16.msra.mxu0 %v1046
        %1070 = vmatprep.subr.bf16.mxu0 0
        %1071 = vmatpush2.bf16.msra.mxu0 0
        %1072 = vmatprep.subr.bf16.mxu0 0
        %1073 = vmatpush2.bf16.msra.mxu0 0
        %1074 = vmatprep.subr.bf16.mxu0 0
        %1075 = vmatpush2.bf16.msra.mxu0 0
        %1076 = vmatprep.subr.bf16.mxu0 0
        %1077 = vmatpush2.bf16.msra.mxu0 0
        %1078 = vmatprep.subr.bf16.mxu0 0
        %1079 = vmatpush2.bf16.msra.mxu0 0
        %1080 = vmatprep.subr.bf16.mxu0 0
        %1081 = vmatpush2.bf16.msra.mxu0 0
        %1082 = vmatprep.subr.bf16.mxu0 0
        %1083 = vmatpush2.bf16.msra.mxu0 0
        %1084 = vmatprep.subr.bf16.mxu0 0
        %1085 = vmatpush2.bf16.msra.mxu0 0
        %1086 = vmatprep.mubr.bf16.mxu0 0
        %1087 = vmatmul.mubr.bf16.gmra.mxu0 %v988
        %v1088 = vpop.f32.mrf.mxu0
        %v1089 = vadd.f32 %v1025, %v1088
        %v1090 = vpop.f32.mrf.mxu0
        %v1091 = vpop.f32.mrf.mxu0
        %v1092 = vpop.f32.mrf.mxu0
        %1093 = vdwg.mxu0
        %v1094 = vlaneseq
        %v1095 = vand.u32 %v1094, 127
        %vm1096 = vcmp.lt.s32.totalorder %v1095, 2
        %v1097 = vsel %vm1096, %v1089, -1e+30
        %1098 = vmax.xlane.f32.xlu0 %v1097
        %v1099 = vpop.xlane.xlu0 %1098
        %v1100 = vsub.f32 %v1097, %v1099
        %v1101 = vmul.f32 %v1100, 1.442695
        %v1102 = vpow.pop %v1101
        %1103 = vadd.xlane.f32.xlu0 %v1102
        %v1104 = vpop.xlane.xlu0 %1103
        %v1105 = vrcp.pop %v1104
        %v1106 = vmul.f32 %v1102, %v1105
        %1107 = vst [vmem:[%s320] sm:$0xff] %v1106
        %s1108 = sand.u32 %s206, 1
        %s1109 = scalar_lea.sflag [#allocation4], %s1108
        %s1110 = sand.u32 %s206, 1
        %s1111 = smul.addr %s1110, 8
        %s1112 = scalar_lea.vmem [#allocation5], %s1111
        // Predicated region
        $region57: #{tpu_custom_call.1} parent=51 // pred_check
          %p1113 = pneg %p216
        $region58: #{tpu_custom_call.1} parent=51 // pred_check_branch
          %1115 = sbr.rel (%p1113) target = $region60
        $region59: #{tpu_custom_call.1} parent=51 // pred_region
          %s1117 = ssub.s32 128, 128
          %1118 = vsyncadd %s1109, %s1117
          %s1119 = smul.addr %s25, 128
          %s1120 = scalar_lea.hbm %s8, %s1119
          %s1122 = sshll.u32 %s1112, 4
          %s1123 = int_to_ptr.vmem [resolvable:$true] %s1122
          %1125 = dma.vmem_to_hbm [thread:$0]  %s1123, 128, %s1120, %s1109
        $region60: #{tpu_custom_call.1} parent=51 // pred_fallthru
          _
      $region52: #{tpu_custom_call.1} parent=5 // pred_fallthru
        _
      %p1126 = scmp.le.s32.totalorder 2, %s20
      // Predicated region
      $region61: #{tpu_custom_call.1} parent=5 // pred_check
        %p1127 = pneg %p1126
      $region62: #{tpu_custom_call.1} parent=5 // pred_check_branch
        %1129 = sbr.rel (%p1127) target = $region64
      $region63: #{tpu_custom_call.1} parent=5 // pred_region
        %s1130 = ssub.s32 %s20, 2
        // Predicated region
        $region65: #{tpu_custom_call.1} parent=63 // pred_check
          %p1131 = pneg %p222
        $region66: #{tpu_custom_call.1} parent=63 // pred_check_branch
          %1133 = sbr.rel (%p1131) target = $region68
        $region67: #{tpu_custom_call.1} parent=63 // pred_region
          %s1134 = sand.u32 %s207, 1
          %s1135 = scalar_lea.sflag [#allocation4], %s1134
          %s1136 = sand.u32 %s207, 1
          %s1137 = smul.addr %s1136, 8
          %s1138 = scalar_lea.vmem [#allocation5], %s1137
          %1139 = dma.done %s1135, 128
        $region68: #{tpu_custom_call.1} parent=63 // pred_fallthru
          _
      $region64: #{tpu_custom_call.1} parent=5 // pred_fallthru
        _
    $region6: #{tpu_custom_call.1} parent=1 // loop_footer
      %s24 = sadd.s32 1, %s20
    $region7: #{tpu_custom_call.1} parent=1 // loop_footer_branch
      %19 = sbr.rel target = $region3
    $region8: #{tpu_custom_call.1} parent=1 // loop_exit
      _
    %1140 = vsyncpa [#allocation3], 1
    %s1141 = scalar_lea.sflag [#allocation3], 1
    %1142 = vsyncpa %s1141, 1
    %1143 = vsyncpa [#allocation4], 1
    %s1144 = scalar_lea.sflag [#allocation4], 1
    %1145 = vsyncpa %s1144, 1

// kernel: tpu_custom_call.1
$region0: #{tpu_custom_call.1}
  #allocation0 [shape = 'u32[]', space=smem, size = 0x4, offset = 0x4, fixed_abs, tag = 'smem constant byte address 0x4 - core index']
  #allocation1 [shape = 'u32[144,128]{1,0:T(1,128)}', space=vmem, size = 0x12000, scoped, tag = 'internal scratch']
  %s0 = inlined_call_operand.hbm [shape: f32[24,32], index: 0, kind: input, shape index: {}]
  %s1 = inlined_call_operand.vmem [shape: f32[32,24], index: 1, kind: input, shape index: {}]
  %s2 = inlined_call_operand.vmem [shape: f32[1,24], index: 2, kind: input, shape index: {}]
  %s3 = inlined_call_operand.vmem [shape: bf16[24,8], index: 3, kind: input, shape index: {}]
  %s4 = inlined_call_operand.vmem [shape: bf16[8,64], index: 4, kind: input, shape index: {}]
  %s5 = inlined_call_operand.vmem [shape: s32[1,64], index: 5, kind: input, shape index: {}]
  %s6 = inlined_call_operand.vmem [shape: bf16[64,128], index: 6, kind: input, shape index: {}]
  %s7 = inlined_call_operand.vmem [shape: bf16[64,128], index: 7, kind: input, shape index: {}]
  %s8 = inlined_call_operand.hbm [shape: f32[24,128], index: 8, kind: output, shape index: {}]
  %s9 = sld [smem:[#allocation0]]
  $region69: #{tpu_custom_call.1} parent=0
    _
  %s11 = ssub.s32 1, %s9
  %s12 = scalar_select 0, %s11, %s9
  $region1: #{tpu_custom_call.1} parent=0
    #allocation2 [shape = 'u8[8192]{0}', space=vmem, size = 0x2000, scoped, tag = 'input window, operand 0']
    #allocation3 [shape = 's32[2]{0}', space=sflag, size = 0x8, scoped, tag = 'scoped memory for tpu_custom_call.1']
    #allocation4 [shape = 's32[2]{0}', space=sflag, size = 0x8, scoped, tag = 'scoped memory for tpu_custom_call.1']
    #allocation5 [shape = 'u8[8192]{0}', space=vmem, size = 0x2000, scoped, tag = 'output window, operand 0']
    %13 = vsyncpa [#allocation3], 0
    %s14 = scalar_lea.sflag [#allocation3], 1
    %15 = vsyncpa %s14, 0
    %16 = vsyncpa [#allocation4], 0
    %s17 = scalar_lea.sflag [#allocation4], 1
    %18 = vsyncpa %s17, 0
    loop: start=0, step=1, limit=5
    $region2: #{tpu_custom_call.1} parent=1 // loop_pre_header
      _
    $region3: #{tpu_custom_call.1} parent=1 // loop_header
      %s20 = sphi 0, %s24
      %p21 = scmp.ge.s32.totalorder %s20, 5
      %s30 = sphi 0, %s32
      %s33 = sphi 0, %s30
      %s34 = sphi 0, %s33
      %s50 = sphi 0, %s34
      %s54 = sphi 0, %s54
      %s56 = sphi 0, %s54
      %s57 = sphi 0, %s56
      %s71 = sphi 0, %s57
      %s75 = sphi 0, %s75
      %s77 = sphi 0, %s75
      %s78 = sphi 0, %s77
      %s92 = sphi 0, %s78
      %s96 = sphi 0, %s96
      %s98 = sphi 0, %s96
      %s99 = sphi 0, %s98
      %s113 = sphi 0, %s99
      %s117 = sphi 0, %s117
      %s119 = sphi 0, %s117
      %s120 = sphi 0, %s119
      %s134 = sphi 0, %s120
      %s138 = sphi 0, %s138
      %s140 = sphi 0, %s138
      %s141 = sphi 0, %s140
      %s155 = sphi 0, %s141
      %s159 = sphi 0, %s159
      %s161 = sphi 0, %s159
      %s162 = sphi 0, %s161
      %s176 = sphi 0, %s162
      %s180 = sphi 0, %s180
      %s182 = sphi 0, %s180
      %s183 = sphi 0, %s182
      %s197 = sphi 0, %s183
      %s203 = sphi 0, %s205
      %s206 = sphi 0, %s203
      %s207 = sphi 0, %s206
      %s223 = sphi 0, %s207
    $region4: #{tpu_custom_call.1} parent=1 // loop_header_branch
      %23 = sbr.rel (%p21) target = $region8
    $region5: #{tpu_custom_call.1} parent=1 // loop_body
      %s25 = ssub.s32 %s20, 1
      %s26 = ssub.s32 %s20, 2
      %s27 = sadd.s32 %s20, 1
      %s28 = ssub.s32 %s20, %s27
      %p29 = scmp.eq.s32.totalorder %s28, 0
      %s31 = sadd.s32 %s30, 1
      %s32 = scalar_select %p29, %s30, %s31
      %p35 = pneg %p29
      %p36 = scmp.eq.s32.totalorder %s20, 2
      %p37 = por %p35, %p36
      %p38 = scmp.ne.s32.totalorder %s30, %s33
      %p39 = scmp.eq.s32.totalorder %s20, 0
      %p40 = por %p38, %p39
      %p41 = scmp.ne.s32.totalorder %s30, %s33
      %p42 = scmp.eq.s32.totalorder %s25, 2
      %p43 = por %p41, %p42
      %p44 = scmp.ne.s32.totalorder %s33, %s34
      %p45 = scmp.eq.s32.totalorder %s25, 0
      %p46 = por %p44, %p45
      %p47 = scmp.ne.s32.totalorder %s33, %s34
      %p48 = scmp.eq.s32.totalorder %s26, 2
      %p49 = por %p47, %p48
      %p51 = scmp.ne.s32.totalorder %s34, %s50
      %p52 = scmp.eq.s32.totalorder %s26, 0
      %p53 = por %p51, %p52
      %s55 = sadd.s32 %s54, 1
      %p58 = scmp.eq.s32.totalorder %s20, 2
      %p59 = scmp.ne.s32.totalorder %s54, %s56
      %p60 = scmp.eq.s32.totalorder %s20, 0
      %p61 = por %p59, %p60
      %p62 = scmp.ne.s32.totalorder %s54, %s56
      %p63 = scmp.eq.s32.totalorder %s25, 2
      %p64 = por %p62, %p63
      %p65 = scmp.ne.s32.totalorder %s56, %s57
      %p66 = scmp.eq.s32.totalorder %s25, 0
      %p67 = por %p65, %p66
      %p68 = scmp.ne.s32.totalorder %s56, %s57
      %p69 = scmp.eq.s32.totalorder %s26, 2
      %p70 = por %p68, %p69
      %p72 = scmp.ne.s32.totalorder %s57, %s71
      %p73 = scmp.eq.s32.totalorder %s26, 0
      %p74 = por %p72, %p73
      %s76 = sadd.s32 %s75, 1
      %p79 = scmp.eq.s32.totalorder %s20, 2
      %p80 = scmp.ne.s32.totalorder %s75, %s77
      %p81 = scmp.eq.s32.totalorder %s20, 0
      %p82 = por %p80, %p81
      %p83 = scmp.ne.s32.totalorder %s75, %s77
      %p84 = scmp.eq.s32.totalorder %s25, 2
      %p85 = por %p83, %p84
      %p86 = scmp.ne.s32.totalorder %s77, %s78
      %p87 = scmp.eq.s32.totalorder %s25, 0
      %p88 = por %p86, %p87
      %p89 = scmp.ne.s32.totalorder %s77, %s78
      %p90 = scmp.eq.s32.totalorder %s26, 2
      %p91 = por %p89, %p90
      %p93 = scmp.ne.s32.totalorder %s78, %s92
      %p94 = scmp.eq.s32.totalorder %s26, 0
      %p95 = por %p93, %p94
      %s97 = sadd.s32 %s96, 1
      %p100 = scmp.eq.s32.totalorder %s20, 2
      %p101 = scmp.ne.s32.totalorder %s96, %s98
      %p102 = scmp.eq.s32.totalorder %s20, 0
      %p103 = por %p101, %p102
      %p104 = scmp.ne.s32.totalorder %s96, %s98
      %p105 = scmp.eq.s32.totalorder %s25, 2
      %p106 = por %p104, %p105
      %p107 = scmp.ne.s32.totalorder %s98, %s99
      %p108 = scmp.eq.s32.totalorder %s25, 0
      %p109 = por %p107, %p108
      %p110 = scmp.ne.s32.totalorder %s98, %s99
      %p111 = scmp.eq.s32.totalorder %s26, 2
      %p112 = por %p110, %p111
      %p114 = scmp.ne.s32.totalorder %s99, %s113
      %p115 = scmp.eq.s32.totalorder %s26, 0
      %p116 = por %p114, %p115
      %s118 = sadd.s32 %s117, 1
      %p121 = scmp.eq.s32.totalorder %s20, 2
      %p122 = scmp.ne.s32.totalorder %s117, %s119
      %p123 = scmp.eq.s32.totalorder %s20, 0
      %p124 = por %p122, %p123
      %p125 = scmp.ne.s32.totalorder %s117, %s119
      %p126 = scmp.eq.s32.totalorder %s25, 2
      %p127 = por %p125, %p126
      %p128 = scmp.ne.s32.totalorder %s119, %s120
      %p129 = scmp.eq.s32.totalorder %s25, 0
      %p130 = por %p128, %p129
      %p131 = scmp.ne.s32.totalorder %s119, %s120
      %p132 = scmp.eq.s32.totalorder %s26, 2
      %p133 = por %p131, %p132
      %p135 = scmp.ne.s32.totalorder %s120, %s134
      %p136 = scmp.eq.s32.totalorder %s26, 0
      %p137 = por %p135, %p136
      %s139 = sadd.s32 %s138, 1
      %p142 = scmp.eq.s32.totalorder %s20, 2
      %p143 = scmp.ne.s32.totalorder %s138, %s140
      %p144 = scmp.eq.s32.totalorder %s20, 0
      %p145 = por %p143, %p144
      %p146 = scmp.ne.s32.totalorder %s138, %s140
      %p147 = scmp.eq.s32.totalorder %s25, 2
      %p148 = por %p146, %p147
      %p149 = scmp.ne.s32.totalorder %s140, %s141
      %p150 = scmp.eq.s32.totalorder %s25, 0
      %p151 = por %p149, %p150
      %p152 = scmp.ne.s32.totalorder %s140, %s141
      %p153 = scmp.eq.s32.totalorder %s26, 2
      %p154 = por %p152, %p153
      %p156 = scmp.ne.s32.totalorder %s141, %s155
      %p157 = scmp.eq.s32.totalorder %s26, 0
      %p158 = por %p156, %p157
      %s160 = sadd.s32 %s159, 1
      %p163 = scmp.eq.s32.totalorder %s20, 2
      %p164 = scmp.ne.s32.totalorder %s159, %s161
      %p165 = scmp.eq.s32.totalorder %s20, 0
      %p166 = por %p164, %p165
      %p167 = scmp.ne.s32.totalorder %s159, %s161
      %p168 = scmp.eq.s32.totalorder %s25, 2
      %p169 = por %p167, %p168
      %p170 = scmp.ne.s32.totalorder %s161, %s162
      %p171 = scmp.eq.s32.totalorder %s25, 0
      %p172 = por %p170, %p171
      %p173 = scmp.ne.s32.totalorder %s161, %s162
      %p174 = scmp.eq.s32.totalorder %s26, 2
      %p175 = por %p173, %p174
      %p177 = scmp.ne.s32.totalorder %s162, %s176
      %p178 = scmp.eq.s32.totalorder %s26, 0
      %p179 = por %p177, %p178
      %s181 = sadd.s32 %s180, 1
      %p184 = scmp.eq.s32.totalorder %s20, 2
      %p185 = scmp.ne.s32.totalorder %s180, %s182
      %p186 = scmp.eq.s32.totalorder %s20, 0
      %p187 = por %p185, %p186
      %p188 = scmp.ne.s32.totalorder %s180, %s182
      %p189 = scmp.eq.s32.totalorder %s25, 2
      %p190 = por %p188, %p189
      %p191 = scmp.ne.s32.totalorder %s182, %s183
      %p192 = scmp.eq.s32.totalorder %s25, 0
      %p193 = por %p191, %p192
      %p194 = scmp.ne.s32.totalorder %s182, %s183
      %p195 = scmp.eq.s32.totalorder %s26, 2
      %p196 = por %p194, %p195
      %p198 = scmp.ne.s32.totalorder %s183, %s197
      %p199 = scmp.eq.s32.totalorder %s26, 0
      %p200 = por %p198, %p199
      %s201 = ssub.s32 %s20, %s27
      %p202 = scmp.eq.s32.totalorder %s201, 0
      %s204 = sadd.s32 %s203, 1
      %s205 = scalar_select %p202, %s203, %s204
      %p208 = pneg %p202
      %p209 = scmp.eq.s32.totalorder %s20, 2
      %p210 = por %p208, %p209
      %p211 = scmp.ne.s32.totalorder %s203, %s206
      %p212 = scmp.eq.s32.totalorder %s20, 0
      %p213 = por %p211, %p212
      %p214 = scmp.ne.s32.totalorder %s203, %s206
      %p215 = scmp.eq.s32.totalorder %s25, 2
      %p216 = por %p214, %p215
      %p217 = scmp.ne.s32.totalorder %s206, %s207
      %p218 = scmp.eq.s32.totalorder %s25, 0
      %p219 = por %p217, %p218
      %p220 = scmp.ne.s32.totalorder %s206, %s207
      %p221 = scmp.eq.s32.totalorder %s26, 2
      %p222 = por %p220, %p221
      %p224 = scmp.ne.s32.totalorder %s207, %s223
      %p225 = scmp.eq.s32.totalorder %s26, 0
      %p226 = por %p224, %p225
      %p227 = scmp.le.s32.totalorder 1, %s20
      %p228 = scmp.lt.s32.totalorder %s20, 4
      %p229 = pnand %p227, %p228
      %p230 = pneg %p229
      // Predicated region
      $region9: #{tpu_custom_call.1} parent=5 // pred_check
        _
      $region10: #{tpu_custom_call.1} parent=5 // pred_check_branch
        %232 = sbr.rel (%p229) target = $region12
      $region11: #{tpu_custom_call.1} parent=5 // pred_region
        %s233 = ssub.s32 %s20, 1
        // Predicated region
        $region13: #{tpu_custom_call.1} parent=11 // pred_check
          %p234 = pneg %p67
        $region14: #{tpu_custom_call.1} parent=11 // pred_check_branch
          %236 = sbr.rel (%p234) target = $region16
        $region15: #{tpu_custom_call.1} parent=11 // pred_region
          _
        $region16: #{tpu_custom_call.1} parent=11 // pred_fallthru
          _
        // Predicated region
        $region17: #{tpu_custom_call.1} parent=11 // pred_check
          %p237 = pneg %p88
        $region18: #{tpu_custom_call.1} parent=11 // pred_check_branch
          %239 = sbr.rel (%p237) target = $region20
        $region19: #{tpu_custom_call.1} parent=11 // pred_region
          _
        $region20: #{tpu_custom_call.1} parent=11 // pred_fallthru
          _
        // Predicated region
        $region21: #{tpu_custom_call.1} parent=11 // pred_check
          %p240 = pneg %p109
        $region22: #{tpu_custom_call.1} parent=11 // pred_check_branch
          %242 = sbr.rel (%p240) target = $region24
        $region23: #{tpu_custom_call.1} parent=11 // pred_region
          _
        $region24: #{tpu_custom_call.1} parent=11 // pred_fallthru
          _
        // Predicated region
        $region25: #{tpu_custom_call.1} parent=11 // pred_check
          %p243 = pneg %p130
        $region26: #{tpu_custom_call.1} parent=11 // pred_check_branch
          %245 = sbr.rel (%p243) target = $region28
        $region27: #{tpu_custom_call.1} parent=11 // pred_region
          _
        $region28: #{tpu_custom_call.1} parent=11 // pred_fallthru
          _
        // Predicated region
        $region29: #{tpu_custom_call.1} parent=11 // pred_check
          %p246 = pneg %p151
        $region30: #{tpu_custom_call.1} parent=11 // pred_check_branch
          %248 = sbr.rel (%p246) target = $region32
        $region31: #{tpu_custom_call.1} parent=11 // pred_region
          _
        $region32: #{tpu_custom_call.1} parent=11 // pred_fallthru
          _
        // Predicated region
        $region33: #{tpu_custom_call.1} parent=11 // pred_check
          %p249 = pneg %p172
        $region34: #{tpu_custom_call.1} parent=11 // pred_check_branch
          %251 = sbr.rel (%p249) target = $region36
        $region35: #{tpu_custom_call.1} parent=11 // pred_region
          _
        $region36: #{tpu_custom_call.1} parent=11 // pred_fallthru
          _
        // Predicated region
        $region37: #{tpu_custom_call.1} parent=11 // pred_check
          %p252 = pneg %p193
        $region38: #{tpu_custom_call.1} parent=11 // pred_check_branch
          %254 = sbr.rel (%p252) target = $region40
        $region39: #{tpu_custom_call.1} parent=11 // pred_region
          _
        $region40: #{tpu_custom_call.1} parent=11 // pred_fallthru
          _
      $region12: #{tpu_custom_call.1} parent=5 // pred_fallthru
        _
      %p255 = scmp.lt.s32.totalorder %s20, 3
      // Predicated region
      $region41: #{tpu_custom_call.1} parent=5 // pred_check
        %p256 = pneg %p255
      $region42: #{tpu_custom_call.1} parent=5 // pred_check_branch
        %258 = sbr.rel (%p256) target = $region44
      $region43: #{tpu_custom_call.1} parent=5 // pred_region
        // Predicated region
        $region45: #{tpu_custom_call.1} parent=43 // pred_check
          %p259 = pneg %p40
        $region46: #{tpu_custom_call.1} parent=43 // pred_check_branch
          %261 = sbr.rel (%p259) target = $region48
        $region47: #{tpu_custom_call.1} parent=43 // pred_region
          %s262 = sand.u32 %s30, 1
          %s263 = scalar_lea.sflag [#allocation3], %s262
          %s264 = sand.u32 %s30, 1
          %s265 = smul.addr %s264, 8
          %s266 = scalar_lea.vmem [#allocation2], %s265
          %s268 = ssub.s32 128, 128
          %269 = vsyncadd %s263, %s268
          %s270 = smul.addr %s20, 128
          %s271 = scalar_lea.hbm %s0, %s270
          %s273 = sshll.u32 %s266, 4
          %s274 = int_to_ptr.vmem [resolvable:$true] %s273
          %276 = dma.hbm_to_vmem [thread:$0]  %s271, 128, %s274, %s263
        $region48: #{tpu_custom_call.1} parent=43 // pred_fallthru
          _
      $region44: #{tpu_custom_call.1} parent=5 // pred_fallthru
        _
      %p277 = scmp.le.s32.totalorder 1, %s20
      %p278 = scmp.lt.s32.totalorder %s20, 4
      %p279 = pnand %p277, %p278
      %p280 = pneg %p279
      // Predicated region
      $region49: #{tpu_custom_call.1} parent=5 // pred_check
        _
      $region50: #{tpu_custom_call.1} parent=5 // pred_check_branch
        %282 = sbr.rel (%p279) target = $region52
      $region51: #{tpu_custom_call.1} parent=5 // pred_region
        %s283 = ssub.s32 %s20, 1
        %s284 = sand.u32 %s33, 1
        %s285 = scalar_lea.sflag [#allocation3], %s284
        %s286 = sand.u32 %s33, 1
        %s287 = smul.addr %s286, 8
        %s288 = scalar_lea.vmem [#allocation2], %s287
        // Predicated region
        $region53: #{tpu_custom_call.1} parent=51 // pred_check
          %p289 = pneg %p46
        $region54: #{tpu_custom_call.1} parent=51 // pred_check_branch
          %291 = sbr.rel (%p289) target = $region56
        $region55: #{tpu_custom_call.1} parent=51 // pred_region
          %292 = dma.done %s285, 128
        $region56: #{tpu_custom_call.1} parent=51 // pred_fallthru
          _
        %s293 = sand.u32 %s33, 1
        %s294 = scalar_lea.sflag [#allocation3], %s293
        %s295 = sand.u32 %s33, 1
        %s296 = smul.addr %s295, 8
        %s297 = scalar_lea.vmem [#allocation2], %s296
        %p298 = pneg %p46
        %p299 = pneg %p43
        %p300 = pneg %p67
        %p301 = pneg %p64
        %p302 = pneg %p88
        %p303 = pneg %p85
        %p304 = pneg %p109
        %p305 = pneg %p106
        %p306 = pneg %p130
        %p307 = pneg %p127
        %p308 = pneg %p151
        %p309 = pneg %p148
        %p310 = pneg %p172
        %p311 = pneg %p169
        %p312 = pneg %p193
        %p313 = pneg %p190
        %p314 = pneg %p219
        %p315 = pneg %p216
        %s316 = sand.u32 %s206, 1
        %s317 = scalar_lea.sflag [#allocation4], %s316
        %s318 = sand.u32 %s206, 1
        %s319 = smul.addr %s318, 8
        %s320 = scalar_lea.vmem [#allocation5], %s319
        %v322 = vld [vmem:[%s288] sm:$0xff]
        %v323 = vld [vmem:[%s1] sm:$0xff]
        %v324 = vld [vmem:[%s1 + $0x8] sm:$0xff]
        %v325 = vld [vmem:[%s1 + $0x10] sm:$0xff]
        %v326 = vld [vmem:[%s1 + $0x18] sm:$0xff]
        %vm327 = vcmask 261120
        %v329 = vsel %vm327, %v322, 0
        %331 = vmatprep.subr.mxu0 0.0
        %332 = vmatpush1.msra.mxu0 0.0
        %333 = vmatprep.subr.mxu0 0.0
        %334 = vmatpush1.msra.mxu0 0.0
        %335 = vmatprep.subr.mxu0 0.0
        %336 = vmatpush1.msra.mxu0 0.0
        %337 = vmatprep.subr.mxu0 0.0
        %338 = vmatpush1.msra.mxu0 0.0
        %339 = vmatprep.subr.mxu0 0.0
        %340 = vmatpush1.msra.mxu0 0.0
        %341 = vmatprep.subr.mxu0 0.0
        %342 = vmatpush1.msra.mxu0 0.0
        %343 = vmatprep.subr.mxu0 0.0
        %344 = vmatpush1.msra.mxu0 0.0
        %345 = vmatprep.subr.mxu0 0.0
        %346 = vmatpush1.msra.mxu0 0.0
        %347 = vmatprep.subr.mxu0 0.0
        %348 = vmatpush1.msra.mxu0 0.0
        %349 = vmatprep.subr.mxu0 0.0
        %350 = vmatpush1.msra.mxu0 0.0
        %351 = vmatprep.subr.mxu0 0.0
        %352 = vmatpush1.msra.mxu0 0.0
        %353 = vmatprep.subr.mxu0 0.0
        %354 = vmatpush1.msra.mxu0 0.0
        %355 = vmatprep.subr.mxu0 0.0
        %v356 = vand.u32 %v326, 4294901760
        %357 = vmatpush1.msra.mxu0 %v356
        %358 = vmatprep.subr.mxu0 0.0
        %v359 = vand.u32 %v325, 4294901760
        %360 = vmatpush1.msra.mxu0 %v359
        %361 = vmatprep.subr.mxu0 0.0
        %v362 = vand.u32 %v324, 4294901760
        %363 = vmatpush1.msra.mxu0 %v362
        %364 = vmatprep.subr.mxu0 0.0
        %v365 = vand.u32 %v323, 4294901760
        %366 = vmatpush1.msra.mxu0 %v365
        %367 = vmatprep.subr.mxu0 0.0
        %368 = vmatpush2.msra.mxu0 0.0
        %369 = vmatprep.subr.mxu0 0.0
        %370 = vmatpush2.msra.mxu0 0.0
        %371 = vmatprep.subr.mxu0 0.0
        %372 = vmatpush2.msra.mxu0 0.0
        %373 = vmatprep.subr.mxu0 0.0
        %374 = vmatpush2.msra.mxu0 0.0
        %375 = vmatprep.subr.mxu0 0.0
        %376 = vmatpush2.msra.mxu0 0.0
        %377 = vmatprep.subr.mxu0 0.0
        %378 = vmatpush2.msra.mxu0 0.0
        %379 = vmatprep.subr.mxu0 0.0
        %380 = vmatpush2.msra.mxu0 0.0
        %381 = vmatprep.subr.mxu0 0.0
        %382 = vmatpush2.msra.mxu0 0.0
        %383 = vmatprep.subr.mxu0 0.0
        %384 = vmatpush2.msra.mxu0 0.0
        %385 = vmatprep.subr.mxu0 0.0
        %386 = vmatpush2.msra.mxu0 0.0
        %387 = vmatprep.subr.mxu0 0.0
        %388 = vmatpush2.msra.mxu0 0.0
        %389 = vmatprep.subr.mxu0 0.0
        %390 = vmatpush2.msra.mxu0 0.0
        %391 = vmatprep.subr.mxu0 0.0
        %392 = vmatpush2.msra.mxu0 0.0
        %393 = vmatprep.subr.mxu0 0.0
        %394 = vmatpush2.msra.mxu0 0.0
        %395 = vmatprep.subr.mxu0 0.0
        %396 = vmatpush2.msra.mxu0 0.0
        %397 = vmatprep.subr.mxu0 0.0
        %398 = vmatpush2.msra.mxu0 0.0
        %399 = vmatprep.mubr.f32.mxu0 0.0
        %v400 = vand.u32 %v329, 4294901760
        %v401 = vsub.f32 %v329, %v400
        %v402 = vand.u32 %v401, 4294901760
        %v403 = vsub.f32 %v401, %v402
        %v404 = vand.u32 %v403, 4294901760
        %405 = vmatmul.mubr.f32.gmra.mxu0 %v404
        %v406 = vpop.f32.mrf.mxu0
        %v407 = vadd.f32 0.0, %v406
        %v408 = vpop.f32.mrf.mxu0
        %409 = vdwg.mxu0
        %410 = vmatprep.subr.mxu0 0.0
        %411 = vmatpush1.msra.mxu0 0.0
        %412 = vmatprep.subr.mxu0 0.0
        %413 = vmatpush1.msra.mxu0 0.0
        %414 = vmatprep.subr.mxu0 0.0
        %415 = vmatpush1.msra.mxu0 0.0
        %416 = vmatprep.subr.mxu0 0.0
        %417 = vmatpush1.msra.mxu0 0.0
        %418 = vmatprep.subr.mxu0 0.0
        %419 = vmatpush1.msra.mxu0 0.0
        %420 = vmatprep.subr.mxu0 0.0
        %421 = vmatpush1.msra.mxu0 0.0
        %422 = vmatprep.subr.mxu0 0.0
        %423 = vmatpush1.msra.mxu0 0.0
        %424 = vmatprep.subr.mxu0 0.0
        %425 = vmatpush1.msra.mxu0 0.0
        %426 = vmatprep.subr.mxu0 0.0
        %427 = vmatpush1.msra.mxu0 0.0
        %428 = vmatprep.subr.mxu0 0.0
        %429 = vmatpush1.msra.mxu0 0.0
        %430 = vmatprep.subr.mxu0 0.0
        %431 = vmatpush1.msra.mxu0 0.0
        %432 = vmatprep.subr.mxu0 0.0
        %433 = vmatpush1.msra.mxu0 0.0
        %434 = vmatprep.subr.mxu0 0.0
        %v435 = vand.u32 %v326, 4294901760
        %v436 = vsub.f32 %v326, %v435
        %v437 = vand.u32 %v436, 4294901760
        %v438 = vsub.f32 %v436, %v437
        %v439 = vand.u32 %v438, 4294901760
        %440 = vmatpush1.msra.mxu0 %v439
        %441 = vmatprep.subr.mxu0 0.0
        %v442 = vand.u32 %v325, 4294901760
        %v443 = vsub.f32 %v325, %v442
        %v444 = vand.u32 %v443, 4294901760
        %v445 = vsub.f32 %v443, %v444
        %v446 = vand.u32 %v445, 4294901760
        %447 = vmatpush1.msra.mxu0 %v446
        %448 = vmatprep.subr.mxu0 0.0
        %v449 = vand.u32 %v324, 4294901760
        %v450 = vsub.f32 %v324, %v449
        %v451 = vand.u32 %v450, 4294901760
        %v452 = vsub.f32 %v450, %v451
        %v453 = vand.u32 %v452, 4294901760
        %454 = vmatpush1.msra.mxu0 %v453
        %455 = vmatprep.subr.mxu0 0.0
        %v456 = vand.u32 %v323, 4294901760
        %v457 = vsub.f32 %v323, %v456
        %v458 = vand.u32 %v457, 4294901760
        %v459 = vsub.f32 %v457, %v458
        %v460 = vand.u32 %v459, 4294901760
        %461 = vmatpush1.msra.mxu0 %v460
        %462 = vmatprep.subr.mxu0 0.0
        %463 = vmatpush2.msra.mxu0 0.0
        %464 = vmatprep.subr.mxu0 0.0
        %465 = vmatpush2.msra.mxu0 0.0
        %466 = vmatprep.subr.mxu0 0.0
        %467 = vmatpush2.msra.mxu0 0.0
        %468 = vmatprep.subr.mxu0 0.0
        %469 = vmatpush2.msra.mxu0 0.0
        %470 = vmatprep.subr.mxu0 0.0
        %471 = vmatpush2.msra.mxu0 0.0
        %472 = vmatprep.subr.mxu0 0.0
        %473 = vmatpush2.msra.mxu0 0.0
        %474 = vmatprep.subr.mxu0 0.0
        %475 = vmatpush2.msra.mxu0 0.0
        %476 = vmatprep.subr.mxu0 0.0
        %477 = vmatpush2.msra.mxu0 0.0
        %478 = vmatprep.subr.mxu0 0.0
        %479 = vmatpush2.msra.mxu0 0.0
        %480 = vmatprep.subr.mxu0 0.0
        %481 = vmatpush2.msra.mxu0 0.0
        %482 = vmatprep.subr.mxu0 0.0
        %483 = vmatpush2.msra.mxu0 0.0
        %484 = vmatprep.subr.mxu0 0.0
        %485 = vmatpush2.msra.mxu0 0.0
        %486 = vmatprep.subr.mxu0 0.0
        %487 = vmatpush2.msra.mxu0 0.0
        %488 = vmatprep.subr.mxu0 0.0
        %489 = vmatpush2.msra.mxu0 0.0
        %490 = vmatprep.subr.mxu0 0.0
        %491 = vmatpush2.msra.mxu0 0.0
        %492 = vmatprep.subr.mxu0 0.0
        %493 = vmatpush2.msra.mxu0 0.0
        %494 = vmatprep.mubr.f32.mxu0 0.0
        %v495 = vand.u32 %v329, 4294901760
        %496 = vmatmul.mubr.f32.gmra.mxu0 %v495
        %v497 = vpop.f32.mrf.mxu0
        %v498 = vadd.f32 %v407, %v497
        %v499 = vpop.f32.mrf.mxu0
        %500 = vdwg.mxu0
        %501 = vmatprep.subr.mxu0 0.0
        %502 = vmatpush1.msra.mxu0 0.0
        %503 = vmatprep.subr.mxu0 0.0
        %504 = vmatpush1.msra.mxu0 0.0
        %505 = vmatprep.subr.mxu0 0.0
        %506 = vmatpush1.msra.mxu0 0.0
        %507 = vmatprep.subr.mxu0 0.0
        %508 = vmatpush1.msra.mxu0 0.0
        %509 = vmatprep.subr.mxu0 0.0
        %510 = vmatpush1.msra.mxu0 0.0
        %511 = vmatprep.subr.mxu0 0.0
        %512 = vmatpush1.msra.mxu0 0.0
        %513 = vmatprep.subr.mxu0 0.0
        %514 = vmatpush1.msra.mxu0 0.0
        %515 = vmatprep.subr.mxu0 0.0
        %516 = vmatpush1.msra.mxu0 0.0
        %517 = vmatprep.subr.mxu0 0.0
        %518 = vmatpush1.msra.mxu0 0.0
        %519 = vmatprep.subr.mxu0 0.0
        %520 = vmatpush1.msra.mxu0 0.0
        %521 = vmatprep.subr.mxu0 0.0
        %522 = vmatpush1.msra.mxu0 0.0
        %523 = vmatprep.subr.mxu0 0.0
        %524 = vmatpush1.msra.mxu0 0.0
        %525 = vmatprep.subr.mxu0 0.0
        %v526 = vand.u32 %v326, 4294901760
        %v527 = vsub.f32 %v326, %v526
        %528 = vmatpush1.msra.mxu0 %v527
        %529 = vmatprep.subr.mxu0 0.0
        %v530 = vand.u32 %v325, 4294901760
        %v531 = vsub.f32 %v325, %v530
        %532 = vmatpush1.msra.mxu0 %v531
        %533 = vmatprep.subr.mxu0 0.0
        %v534 = vand.u32 %v324, 4294901760
        %v535 = vsub.f32 %v324, %v534
        %536 = vmatpush1.msra.mxu0 %v535
        %537 = vmatprep.subr.mxu0 0.0
        %v538 = vand.u32 %v323, 4294901760
        %v539 = vsub.f32 %v323, %v538
        %540 = vmatpush1.msra.mxu0 %v539
        %541 = vmatprep.subr.mxu0 0.0
        %542 = vmatpush2.msra.mxu0 0.0
        %543 = vmatprep.subr.mxu0 0.0
        %544 = vmatpush2.msra.mxu0 0.0
        %545 = vmatprep.subr.mxu0 0.0
        %546 = vmatpush2.msra.mxu0 0.0
        %547 = vmatprep.subr.mxu0 0.0
        %548 = vmatpush2.msra.mxu0 0.0
        %549 = vmatprep.subr.mxu0 0.0
        %550 = vmatpush2.msra.mxu0 0.0
        %551 = vmatprep.subr.mxu0 0.0
        %552 = vmatpush2.msra.mxu0 0.0
        %553 = vmatprep.subr.mxu0 0.0
        %554 = vmatpush2.msra.mxu0 0.0
        %555 = vmatprep.subr.mxu0 0.0
        %556 = vmatpush2.msra.mxu0 0.0
        %557 = vmatprep.subr.mxu0 0.0
        %558 = vmatpush2.msra.mxu0 0.0
        %559 = vmatprep.subr.mxu0 0.0
        %560 = vmatpush2.msra.mxu0 0.0
        %561 = vmatprep.subr.mxu0 0.0
        %562 = vmatpush2.msra.mxu0 0.0
        %563 = vmatprep.subr.mxu0 0.0
        %564 = vmatpush2.msra.mxu0 0.0
        %565 = vmatprep.subr.mxu0 0.0
        %566 = vmatpush2.msra.mxu0 0.0
        %567 = vmatprep.subr.mxu0 0.0
        %568 = vmatpush2.msra.mxu0 0.0
        %569 = vmatprep.subr.mxu0 0.0
        %570 = vmatpush2.msra.mxu0 0.0
        %571 = vmatprep.subr.mxu0 0.0
        %572 = vmatpush2.msra.mxu0 0.0
        %573 = vmatprep.mubr.f32.mxu0 0.0
        %v574 = vand.u32 %v329, 4294901760
        %v575 = vsub.f32 %v329, %v574
        %576 = vmatmul.mubr.f32.gmra.mxu0 %v575
        %v577 = vpop.f32.mrf.mxu0
        %v578 = vadd.f32 %v498, %v577
        %v579 = vpop.f32.mrf.mxu0
        %580 = vdwg.mxu0
        %581 = vmatprep.subr.mxu0 0.0
        %582 = vmatpush1.msra.mxu0 0.0
        %583 = vmatprep.subr.mxu0 0.0
        %584 = vmatpush1.msra.mxu0 0.0
        %585 = vmatprep.subr.mxu0 0.0
        %586 = vmatpush1.msra.mxu0 0.0
        %587 = vmatprep.subr.mxu0 0.0
        %588 = vmatpush1.msra.mxu0 0.0
        %589 = vmatprep.subr.mxu0 0.0
        %590 = vmatpush1.msra.mxu0 0.0
        %591 = vmatprep.subr.mxu0 0.0
        %592 = vmatpush1.msra.mxu0 0.0
        %593 = vmatprep.subr.mxu0 0.0
        %594 = vmatpush1.msra.mxu0 0.0
        %595 = vmatprep.subr.mxu0 0.0
        %596 = vmatpush1.msra.mxu0 0.0
        %597 = vmatprep.subr.mxu0 0.0
        %598 = vmatpush1.msra.mxu0 0.0
        %599 = vmatprep.subr.mxu0 0.0
        %600 = vmatpush1.msra.mxu0 0.0
        %601 = vmatprep.subr.mxu0 0.0
        %602 = vmatpush1.msra.mxu0 0.0
        %603 = vmatprep.subr.mxu0 0.0
        %604 = vmatpush1.msra.mxu0 0.0
        %605 = vmatprep.subr.mxu0 0.0
        %v606 = vand.u32 %v326, 4294901760
        %607 = vmatpush1.msra.mxu0 %v606
        %608 = vmatprep.subr.mxu0 0.0
        %v609 = vand.u32 %v325, 4294901760
        %610 = vmatpush1.msra.mxu0 %v609
        %611 = vmatprep.subr.mxu0 0.0
        %v612 = vand.u32 %v324, 4294901760
        %613 = vmatpush1.msra.mxu0 %v612
        %614 = vmatprep.subr.mxu0 0.0
        %v615 = vand.u32 %v323, 4294901760
        %616 = vmatpush1.msra.mxu0 %v615
        %617 = vmatprep.subr.mxu0 0.0
        %618 = vmatpush2.msra.mxu0 0.0
        %619 = vmatprep.subr.mxu0 0.0
        %620 = vmatpush2.msra.mxu0 0.0
        %621 = vmatprep.subr.mxu0 0.0
        %622 = vmatpush2.msra.mxu0 0.0
        %623 = vmatprep.subr.mxu0 0.0
        %624 = vmatpush2.msra.mxu0 0.0
        %625 = vmatprep.subr.mxu0 0.0
        %626 = vmatpush2.msra.mxu0 0.0
        %627 = vmatprep.subr.mxu0 0.0
        %628 = vmatpush2.msra.mxu0 0.0
        %629 = vmatprep.subr.mxu0 0.0
        %630 = vmatpush2.msra.mxu0 0.0
        %631 = vmatprep.subr.mxu0 0.0
        %632 = vmatpush2.msra.mxu0 0.0
        %633 = vmatprep.subr.mxu0 0.0
        %634 = vmatpush2.msra.mxu0 0.0
        %635 = vmatprep.subr.mxu0 0.0
        %636 = vmatpush2.msra.mxu0 0.0
        %637 = vmatprep.subr.mxu0 0.0
        %638 = vmatpush2.msra.mxu0 0.0
        %639 = vmatprep.subr.mxu0 0.0
        %640 = vmatpush2.msra.mxu0 0.0
        %641 = vmatprep.subr.mxu0 0.0
        %642 = vmatpush2.msra.mxu0 0.0
        %643 = vmatprep.subr.mxu0 0.0
        %644 = vmatpush2.msra.mxu0 0.0
        %645 = vmatprep.subr.mxu0 0.0
        %646 = vmatpush2.msra.mxu0 0.0
        %647 = vmatprep.subr.mxu0 0.0
        %648 = vmatpush2.msra.mxu0 0.0
        %649 = vmatprep.mubr.f32.mxu0 0.0
        %v650 = vand.u32 %v329, 4294901760
        %v651 = vsub.f32 %v329, %v650
        %v652 = vand.u32 %v651, 4294901760
        %653 = vmatmul.mubr.f32.gmra.mxu0 %v652
        %v654 = vpop.f32.mrf.mxu0
        %v655 = vadd.f32 %v578, %v654
        %v656 = vpop.f32.mrf.mxu0
        %657 = vdwg.mxu0
        %658 = vmatprep.subr.mxu0 0.0
        %659 = vmatpush1.msra.mxu0 0.0
        %660 = vmatprep.subr.mxu0 0.0
        %661 = vmatpush1.msra.mxu0 0.0
        %662 = vmatprep.subr.mxu0 0.0
        %663 = vmatpush1.msra.mxu0 0.0
        %664 = vmatprep.subr.mxu0 0.0
        %665 = vmatpush1.msra.mxu0 0.0
        %666 = vmatprep.subr.mxu0 0.0
        %667 = vmatpush1.msra.mxu0 0.0
        %668 = vmatprep.subr.mxu0 0.0
        %669 = vmatpush1.msra.mxu0 0.0
        %670 = vmatprep.subr.mxu0 0.0
        %671 = vmatpush1.msra.mxu0 0.0
        %672 = vmatprep.subr.mxu0 0.0
        %673 = vmatpush1.msra.mxu0 0.0
        %674 = vmatprep.subr.mxu0 0.0
        %675 = vmatpush1.msra.mxu0 0.0
        %676 = vmatprep.subr.mxu0 0.0
        %677 = vmatpush1.msra.mxu0 0.0
        %678 = vmatprep.subr.mxu0 0.0
        %679 = vmatpush1.msra.mxu0 0.0
        %680 = vmatprep.subr.mxu0 0.0
        %681 = vmatpush1.msra.mxu0 0.0
        %682 = vmatprep.subr.mxu0 0.0
        %v683 = vand.u32 %v326, 4294901760
        %v684 = vsub.f32 %v326, %v683
        %v685 = vand.u32 %v684, 4294901760
        %686 = vmatpush1.msra.mxu0 %v685
        %687 = vmatprep.subr.mxu0 0.0
        %v688 = vand.u32 %v325, 4294901760
        %v689 = vsub.f32 %v325, %v688
        %v690 = vand.u32 %v689, 4294901760
        %691 = vmatpush1.msra.mxu0 %v690
        %692 = vmatprep.subr.mxu0 0.0
        %v693 = vand.u32 %v324, 4294901760
        %v694 = vsub.f32 %v324, %v693
        %v695 = vand.u32 %v694, 4294901760
        %696 = vmatpush1.msra.mxu0 %v695
        %697 = vmatprep.subr.mxu0 0.0
        %v698 = vand.u32 %v323, 4294901760
        %v699 = vsub.f32 %v323, %v698
        %v700 = vand.u32 %v699, 4294901760
        %701 = vmatpush1.msra.mxu0 %v700
        %702 = vmatprep.subr.mxu0 0.0
        %703 = vmatpush2.msra.mxu0 0.0
        %704 = vmatprep.subr.mxu0 0.0
        %705 = vmatpush2.msra.mxu0 0.0
        %706 = vmatprep.subr.mxu0 0.0
        %707 = vmatpush2.msra.mxu0 0.0
        %708 = vmatprep.subr.mxu0 0.0
        %709 = vmatpush2.msra.mxu0 0.0
        %710 = vmatprep.subr.mxu0 0.0
        %711 = vmatpush2.msra.mxu0 0.0
        %712 = vmatprep.subr.mxu0 0.0
        %713 = vmatpush2.msra.mxu0 0.0
        %714 = vmatprep.subr.mxu0 0.0
        %715 = vmatpush2.msra.mxu0 0.0
        %716 = vmatprep.subr.mxu0 0.0
        %717 = vmatpush2.msra.mxu0 0.0
        %718 = vmatprep.subr.mxu0 0.0
        %719 = vmatpush2.msra.mxu0 0.0
        %720 = vmatprep.subr.mxu0 0.0
        %721 = vmatpush2.msra.mxu0 0.0
        %722 = vmatprep.subr.mxu0 0.0
        %723 = vmatpush2.msra.mxu0 0.0
        %724 = vmatprep.subr.mxu0 0.0
        %725 = vmatpush2.msra.mxu0 0.0
        %726 = vmatprep.subr.mxu0 0.0
        %727 = vmatpush2.msra.mxu0 0.0
        %728 = vmatprep.subr.mxu0 0.0
        %729 = vmatpush2.msra.mxu0 0.0
        %730 = vmatprep.subr.mxu0 0.0
        %731 = vmatpush2.msra.mxu0 0.0
        %732 = vmatprep.subr.mxu0 0.0
        %733 = vmatpush2.msra.mxu0 0.0
        %734 = vmatprep.mubr.f32.mxu0 0.0
        %v735 = vand.u32 %v329, 4294901760
        %736 = vmatmul.mubr.f32.gmra.mxu0 %v735
        %v737 = vpop.f32.mrf.mxu0
        %v738 = vadd.f32 %v655, %v737
        %v739 = vpop.f32.mrf.mxu0
        %740 = vdwg.mxu0
        %741 = vmatprep.subr.mxu0 0.0
        %742 = vmatpush1.msra.mxu0 0.0
        %743 = vmatprep.subr.mxu0 0.0
        %744 = vmatpush1.msra.mxu0 0.0
        %745 = vmatprep.subr.mxu0 0.0
        %746 = vmatpush1.msra.mxu0 0.0
        %747 = vmatprep.subr.mxu0 0.0
        %748 = vmatpush1.msra.mxu0 0.0
        %749 = vmatprep.subr.mxu0 0.0
        %750 = vmatpush1.msra.mxu0 0.0
        %751 = vmatprep.subr.mxu0 0.0
        %752 = vmatpush1.msra.mxu0 0.0
        %753 = vmatprep.subr.mxu0 0.0
        %754 = vmatpush1.msra.mxu0 0.0
        %755 = vmatprep.subr.mxu0 0.0
        %756 = vmatpush1.msra.mxu0 0.0
        %757 = vmatprep.subr.mxu0 0.0
        %758 = vmatpush1.msra.mxu0 0.0
        %759 = vmatprep.subr.mxu0 0.0
        %760 = vmatpush1.msra.mxu0 0.0
        %761 = vmatprep.subr.mxu0 0.0
        %762 = vmatpush1.msra.mxu0 0.0
        %763 = vmatprep.subr.mxu0 0.0
        %764 = vmatpush1.msra.mxu0 0.0
        %765 = vmatprep.subr.mxu0 0.0
        %v766 = vand.u32 %v326, 4294901760
        %767 = vmatpush1.msra.mxu0 %v766
        %768 = vmatprep.subr.mxu0 0.0
        %v769 = vand.u32 %v325, 4294901760
        %770 = vmatpush1.msra.mxu0 %v769
        %771 = vmatprep.subr.mxu0 0.0
        %v772 = vand.u32 %v324, 4294901760
        %773 = vmatpush1.msra.mxu0 %v772
        %774 = vmatprep.subr.mxu0 0.0
        %v775 = vand.u32 %v323, 4294901760
        %776 = vmatpush1.msra.mxu0 %v775
        %777 = vmatprep.subr.mxu0 0.0
        %778 = vmatpush2.msra.mxu0 0.0
        %779 = vmatprep.subr.mxu0 0.0
        %780 = vmatpush2.msra.mxu0 0.0
        %781 = vmatprep.subr.mxu0 0.0
        %782 = vmatpush2.msra.mxu0 0.0
        %783 = vmatprep.subr.mxu0 0.0
        %784 = vmatpush2.msra.mxu0 0.0
        %785 = vmatprep.subr.mxu0 0.0
        %786 = vmatpush2.msra.mxu0 0.0
        %787 = vmatprep.subr.mxu0 0.0
        %788 = vmatpush2.msra.mxu0 0.0
        %789 = vmatprep.subr.mxu0 0.0
        %790 = vmatpush2.msra.mxu0 0.0
        %791 = vmatprep.subr.mxu0 0.0
        %792 = vmatpush2.msra.mxu0 0.0
        %793 = vmatprep.subr.mxu0 0.0
        %794 = vmatpush2.msra.mxu0 0.0
        %795 = vmatprep.subr.mxu0 0.0
        %796 = vmatpush2.msra.mxu0 0.0
        %797 = vmatprep.subr.mxu0 0.0
        %798 = vmatpush2.msra.mxu0 0.0
        %799 = vmatprep.subr.mxu0 0.0
        %800 = vmatpush2.msra.mxu0 0.0
        %801 = vmatprep.subr.mxu0 0.0
        %802 = vmatpush2.msra.mxu0 0.0
        %803 = vmatprep.subr.mxu0 0.0
        %804 = vmatpush2.msra.mxu0 0.0
        %805 = vmatprep.subr.mxu0 0.0
        %806 = vmatpush2.msra.mxu0 0.0
        %807 = vmatprep.subr.mxu0 0.0
        %808 = vmatpush2.msra.mxu0 0.0
        %809 = vmatprep.mubr.f32.mxu0 0.0
        %v810 = vand.u32 %v329, 4294901760
        %811 = vmatmul.mubr.f32.gmra.mxu0 %v810
        %v812 = vpop.f32.mrf.mxu0
        %v813 = vadd.f32 %v738, %v812
        %v814 = vpop.f32.mrf.mxu0
        %815 = vdwg.mxu0
        %v816 = vld [vmem:[%s2] sm:$0x1]
        %v818 = vlaneseq
        %v819 = vshrl.u32 %v818, 7
        %v820 = vsub.s32 0, %v819
        %v821 = vrot.slane %v816, %v820
        %vm823 = vcmp.gt.f32.partialorder %v813, %v821
        %v824 = vsel %vm823, 1, 0
        %v825 = vcvt.s32.f32 %v824
        %v826 = vpack.c.bf16 %v825, %v825
        %v827 = vld [vmem:[%s3] sm:$0xf]
        %v828 = vld [vmem:[%s3 + $0x4] sm:$0xf]
        %v829 = vld [vmem:[%s3 + $0x8] sm:$0xf]
        %v833 = vunpack.c.l.b16 %v827
        %v834 = vunpack.c.l.b16 %v828
        %v835 = vunpack.c.l.b16 %v829
        %v836 = vpack.c.b16 %v834, %v833
        %v837 = vpack.c.b16 %v835, %v835
        %vm839 = vcmask 195584
        %v841 = vsel %vm839, %v826, 0
        %vm843 = vcmask 1043456
        %v845 = vsel %vm843, %v837, 0
        %847 = vmatprep.subr.bf16.mxu0 0
        %848 = vmatpush1.bf16.msra.mxu0 0
        %849 = vmatprep.subr.bf16.mxu0 0
        %850 = vmatpush1.bf16.msra.mxu0 0
        %851 = vmatprep.subr.bf16.mxu0 0
        %852 = vmatpush1.bf16.msra.mxu0 0
        %853 = vmatprep.subr.bf16.mxu0 0
        %854 = vmatpush1.bf16.msra.mxu0 0
        %855 = vmatprep.subr.bf16.mxu0 0
        %856 = vmatpush1.bf16.msra.mxu0 0
        %857 = vmatprep.subr.bf16.mxu0 0
        %858 = vmatpush1.bf16.msra.mxu0 0
        %859 = vmatprep.subr.bf16.mxu0 0
        %860 = vmatpush1.bf16.msra.mxu0 %v845
        %861 = vmatprep.subr.bf16.mxu0 0
        %862 = vmatpush1.bf16.msra.mxu0 %v836
        %863 = vmatprep.subr.bf16.mxu0 0
        %864 = vmatpush2.bf16.msra.mxu0 0
        %865 = vmatprep.subr.bf16.mxu0 0
        %866 = vmatpush2.bf16.msra.mxu0 0
        %867 = vmatprep.subr.bf16.mxu0 0
        %868 = vmatpush2.bf16.msra.mxu0 0
        %869 = vmatprep.subr.bf16.mxu0 0
        %870 = vmatpush2.bf16.msra.mxu0 0
        %871 = vmatprep.subr.bf16.mxu0 0
        %872 = vmatpush2.bf16.msra.mxu0 0
        %873 = vmatprep.subr.bf16.mxu0 0
        %874 = vmatpush2.bf16.msra.mxu0 0
        %875 = vmatprep.subr.bf16.mxu0 0
        %876 = vmatpush2.bf16.msra.mxu0 0
        %877 = vmatprep.subr.bf16.mxu0 0
        %878 = vmatpush2.bf16.msra.mxu0 0
        %879 = vmatprep.mubr.bf16.mxu0 0
        %880 = vmatmul.mubr.bf16.gmra.mxu0 %v841
        %v881 = vpop.f32.mrf.mxu0
        %v882 = vadd.f32 0.0, %v881
        %v883 = vpop.f32.mrf.mxu0
        %v884 = vpop.f32.mrf.mxu0
        %v885 = vpop.f32.mrf.mxu0
        %886 = vdwg.mxu0
        %v887 = vpack.c.bf16 %v882, %v882
        %v888 = vld [vmem:[%s4] sm:$0xf]
        %vm889 = vcmask 64512
        %v891 = vsel %vm889, %v887, 0
        %v894 = vsel %vm843, %v888, 0
        %896 = vmatprep.subr.bf16.mxu0 0
        %897 = vmatpush1.bf16.msra.mxu0 0
        %898 = vmatprep.subr.bf16.mxu0 0
        %899 = vmatpush1.bf16.msra.mxu0 0
        %900 = vmatprep.subr.bf16.mxu0 0
        %901 = vmatpush1.bf16.msra.mxu0 0
        %902 = vmatprep.subr.bf16.mxu0 0
        %903 = vmatpush1.bf16.msra.mxu0 0
        %904 = vmatprep.subr.bf16.mxu0 0
        %905 = vmatpush1.bf16.msra.mxu0 0
        %906 = vmatprep.subr.bf16.mxu0 0
        %907 = vmatpush1.bf16.msra.mxu0 0
        %908 = vmatprep.subr.bf16.mxu0 0
        %909 = vmatpush1.bf16.msra.mxu0 0
        %910 = vmatprep.subr.bf16.mxu0 0
        %911 = vmatpush1.bf16.msra.mxu0 %v894
        %912 = vmatprep.subr.bf16.mxu0 0
        %913 = vmatpush2.bf16.msra.mxu0 0
        %914 = vmatprep.subr.bf16.mxu0 0
        %915 = vmatpush2.bf16.msra.mxu0 0
        %916 = vmatprep.subr.bf16.mxu0 0
        %917 = vmatpush2.bf16.msra.mxu0 0
        %918 = vmatprep.subr.bf16.mxu0 0
        %919 = vmatpush2.bf16.msra.mxu0 0
        %920 = vmatprep.subr.bf16.mxu0 0
        %921 = vmatpush2.bf16.msra.mxu0 0
        %922 = vmatprep.subr.bf16.mxu0 0
        %923 = vmatpush2.bf16.msra.mxu0 0
        %924 = vmatprep.subr.bf16.mxu0 0
        %925 = vmatpush2.bf16.msra.mxu0 0
        %926 = vmatprep.subr.bf16.mxu0 0
        %927 = vmatpush2.bf16.msra.mxu0 0
        %928 = vmatprep.mubr.bf16.mxu0 0
        %929 = vmatmul.mubr.bf16.gmra.mxu0 %v891
        %v930 = vpop.f32.mrf.mxu0
        %v931 = vadd.f32 0.5, %v930
        %v932 = vpop.f32.mrf.mxu0
        %v933 = vpop.f32.mrf.mxu0
        %v934 = vpop.f32.mrf.mxu0
        %935 = vdwg.mxu0
        %v936 = vcvt.f32.s32.to.zero.pseudo %v931
        %v937 = vld [vmem:[%s5] sm:$0x1]
        %v938 = vlaneseq
        %v939 = vshrl.u32 %v938, 7
        %v940 = vsub.s32 0, %v939
        %v941 = vrot.slane %v937, %v940
        %vm942 = vcmp.eq.s32.totalorder %v936, %v941
        %v943 = vsel %vm942, 1, 0
        %v944 = vcvt.s32.f32 %v943
        %v945 = vpack.c.bf16 %v944, %v944
        %v946 = vld [vmem:[%s6] sm:$0xf]
        %v947 = vld [vmem:[%s6 + $0x4] sm:$0xf]
        %v948 = vld [vmem:[%s6 + $0x8] sm:$0xf]
        %v949 = vld [vmem:[%s6 + $0xc] sm:$0xf]
        %v950 = vld [vmem:[%s6 + $0x10] sm:$0xf]
        %v951 = vld [vmem:[%s6 + $0x14] sm:$0xf]
        %v952 = vld [vmem:[%s6 + $0x18] sm:$0xf]
        %v953 = vld [vmem:[%s6 + $0x1c] sm:$0xf]
        %v954 = vld [vmem:[%s7] sm:$0xf]
        %v955 = vld [vmem:[%s7 + $0x4] sm:$0xf]
        %v956 = vld [vmem:[%s7 + $0x8] sm:$0xf]
        %v957 = vld [vmem:[%s7 + $0xc] sm:$0xf]
        %v958 = vld [vmem:[%s7 + $0x10] sm:$0xf]
        %v959 = vld [vmem:[%s7 + $0x14] sm:$0xf]
        %v960 = vld [vmem:[%s7 + $0x18] sm:$0xf]
        %v961 = vld [vmem:[%s7 + $0x1c] sm:$0xf]
        %v970 = vunpack.c.l.b16 %v954
        %v971 = vunpack.c.l.b16 %v955
        %v972 = vunpack.c.l.b16 %v956
        %v973 = vunpack.c.l.b16 %v957
        %v974 = vunpack.c.l.b16 %v958
        %v975 = vunpack.c.l.b16 %v959
        %v976 = vunpack.c.l.b16 %v960
        %v977 = vunpack.c.l.b16 %v961
        %v978 = vpack.c.b16 %v971, %v970
        %v979 = vpack.c.b16 %v973, %v972
        %v980 = vpack.c.b16 %v975, %v974
        %v981 = vpack.c.b16 %v977, %v976
        %vm986 = vcmask 523264
        %v988 = vsel %vm986, %v945, 0
        %990 = vmatprep.subr.bf16.mxu0 0
        %991 = vmatpush1.bf16.msra.mxu0 0
        %992 = vmatprep.subr.bf16.mxu0 0
        %993 = vmatpush1.bf16.msra.mxu0 0
        %994 = vmatprep.subr.bf16.mxu0 0
        %995 = vmatpush1.bf16.msra.mxu0 0
        %996 = vmatprep.subr.bf16.mxu0 0
        %997 = vmatpush1.bf16.msra.mxu0 0
        %998 = vmatprep.subr.bf16.mxu0 0
        %999 = vmatpush1.bf16.msra.mxu0 %v981
        %1000 = vmatprep.subr.bf16.mxu0 0
        %1001 = vmatpush1.bf16.msra.mxu0 %v980
        %1002 = vmatprep.subr.bf16.mxu0 0
        %1003 = vmatpush1.bf16.msra.mxu0 %v979
        %1004 = vmatprep.subr.bf16.mxu0 0
        %1005 = vmatpush1.bf16.msra.mxu0 %v978
        %1006 = vmatprep.subr.bf16.mxu0 0
        %1007 = vmatpush2.bf16.msra.mxu0 0
        %1008 = vmatprep.subr.bf16.mxu0 0
        %1009 = vmatpush2.bf16.msra.mxu0 0
        %1010 = vmatprep.subr.bf16.mxu0 0
        %1011 = vmatpush2.bf16.msra.mxu0 0
        %1012 = vmatprep.subr.bf16.mxu0 0
        %1013 = vmatpush2.bf16.msra.mxu0 0
        %1014 = vmatprep.subr.bf16.mxu0 0
        %1015 = vmatpush2.bf16.msra.mxu0 0
        %1016 = vmatprep.subr.bf16.mxu0 0
        %1017 = vmatpush2.bf16.msra.mxu0 0
        %1018 = vmatprep.subr.bf16.mxu0 0
        %1019 = vmatpush2.bf16.msra.mxu0 0
        %1020 = vmatprep.subr.bf16.mxu0 0
        %1021 = vmatpush2.bf16.msra.mxu0 0
        %1022 = vmatprep.mubr.bf16.mxu0 0
        %1023 = vmatmul.mubr.bf16.gmra.mxu0 %v988
        %v1024 = vpop.f32.mrf.mxu0
        %v1025 = vadd.f32 0.0, %v1024
        %v1026 = vpop.f32.mrf.mxu0
        %v1027 = vpop.f32.mrf.mxu0
        %v1028 = vpop.f32.mrf.mxu0
        %1029 = vdwg.mxu0
        %v1038 = vunpack.c.l.b16 %v946
        %v1039 = vunpack.c.l.b16 %v947
        %v1040 = vunpack.c.l.b16 %v948
        %v1041 = vunpack.c.l.b16 %v949
        %v1042 = vunpack.c.l.b16 %v950
        %v1043 = vunpack.c.l.b16 %v951
        %v1044 = vunpack.c.l.b16 %v952
        %v1045 = vunpack.c.l.b16 %v953
        %v1046 = vpack.c.b16 %v1039, %v1038
        %v1047 = vpack.c.b16 %v1041, %v1040
        %v1048 = vpack.c.b16 %v1043, %v1042
        %v1049 = vpack.c.b16 %v1045, %v1044
        %1054 = vmatprep.subr.bf16.mxu0 0
        %1055 = vmatpush1.bf16.msra.mxu0 0
        %1056 = vmatprep.subr.bf16.mxu0 0
        %1057 = vmatpush1.bf16.msra.mxu0 0
        %1058 = vmatprep.subr.bf16.mxu0 0
        %1059 = vmatpush1.bf16.msra.mxu0 0
        %1060 = vmatprep.subr.bf16.mxu0 0
        %1061 = vmatpush1.bf16.msra.mxu0 0
        %1062 = vmatprep.subr.bf16.mxu0 0
        %1063 = vmatpush1.bf16.msra.mxu0 %v1049
        %1064 = vmatprep.subr.bf16.mxu0 0
        %1065 = vmatpush1.bf16.msra.mxu0 %v1048
        %1066 = vmatprep.subr.bf16.mxu0 0
        %1067 = vmatpush1.bf16.msra.mxu0 %v1047
        %1068 = vmatprep.subr.bf16.mxu0 0
        %1069 = vmatpush1.bf16.msra.mxu0 %v1046
        %1070 = vmatprep.subr.bf16.mxu0 0
        %1071 = vmatpush2.bf16.msra.mxu0 0
        %1072 = vmatprep.subr.bf16.mxu0 0
        %1073 = vmatpush2.bf16.msra.mxu0 0
        %1074 = vmatprep.subr.bf16.mxu0 0
        %1075 = vmatpush2.bf16.msra.mxu0 0
        %1076 = vmatprep.subr.bf16.mxu0 0
        %1077 = vmatpush2.bf16.msra.mxu0 0
        %1078 = vmatprep.subr.bf16.mxu0 0
        %1079 = vmatpush2.bf16.msra.mxu0 0
        %1080 = vmatprep.subr.bf16.mxu0 0
        %1081 = vmatpush2.bf16.msra.mxu0 0
        %1082 = vmatprep.subr.bf16.mxu0 0
        %1083 = vmatpush2.bf16.msra.mxu0 0
        %1084 = vmatprep.subr.bf16.mxu0 0
        %1085 = vmatpush2.bf16.msra.mxu0 0
        %1086 = vmatprep.mubr.bf16.mxu0 0
        %1087 = vmatmul.mubr.bf16.gmra.mxu0 %v988
        %v1088 = vpop.f32.mrf.mxu0
        %v1089 = vadd.f32 %v1025, %v1088
        %v1090 = vpop.f32.mrf.mxu0
        %v1091 = vpop.f32.mrf.mxu0
        %v1092 = vpop.f32.mrf.mxu0
        %1093 = vdwg.mxu0
        %v1094 = vlaneseq
        %v1095 = vand.u32 %v1094, 127
        %vm1096 = vcmp.lt.s32.totalorder %v1095, 2
        %v1097 = vsel %vm1096, %v1089, -1e+30
        %1098 = vmax.xlane.f32.xlu0 %v1097
        %v1099 = vpop.xlane.xlu0 %1098
        %v1100 = vsub.f32 %v1097, %v1099
        %v1101 = vmul.f32 %v1100, 1.442695
        %v1102 = vpow.pop %v1101
        %1103 = vadd.xlane.f32.xlu0 %v1102
        %v1104 = vpop.xlane.xlu0 %1103
        %v1105 = vrcp.pop %v1104
        %v1106 = vmul.f32 %v1102, %v1105
        %1107 = vst [vmem:[%s320] sm:$0xff] %v1106
        %s1108 = sand.u32 %s206, 1
        %s1109 = scalar_lea.sflag [#allocation4], %s1108
        %s1110 = sand.u32 %s206, 1
        %s1111 = smul.addr %s1110, 8
        %s1112 = scalar_lea.vmem [#allocation5], %s1111
        // Predicated region
        $region57: #{tpu_custom_call.1} parent=51 // pred_check
          %p1113 = pneg %p216
        $region58: #{tpu_custom_call.1} parent=51 // pred_check_branch
          %1115 = sbr.rel (%p1113) target = $region60
        $region59: #{tpu_custom_call.1} parent=51 // pred_region
          %s1117 = ssub.s32 128, 128
          %1118 = vsyncadd %s1109, %s1117
          %s1119 = smul.addr %s25, 128
          %s1120 = scalar_lea.hbm %s8, %s1119
          %s1122 = sshll.u32 %s1112, 4
          %s1123 = int_to_ptr.vmem [resolvable:$true] %s1122
          %1125 = dma.vmem_to_hbm [thread:$0]  %s1123, 128, %s1120, %s1109
        $region60: #{tpu_custom_call.1} parent=51 // pred_fallthru
          _
      $region52: #{tpu_custom_call.1} parent=5 // pred_fallthru
        _
      %p1126 = scmp.le.s32.totalorder 2, %s20
      // Predicated region
      $region61: #{tpu_custom_call.1} parent=5 // pred_check
        %p1127 = pneg %p1126
      $region62: #{tpu_custom_call.1} parent=5 // pred_check_branch
        %1129 = sbr.rel (%p1127) target = $region64
      $region63: #{tpu_custom_call.1} parent=5 // pred_region
        %s1130 = ssub.s32 %s20, 2
        // Predicated region
        $region65: #{tpu_custom_call.1} parent=63 // pred_check
          %p1131 = pneg %p222
        $region66: #{tpu_custom_call.1} parent=63 // pred_check_branch
          %1133 = sbr.rel (%p1131) target = $region68
        $region67: #{tpu_custom_call.1} parent=63 // pred_region
          %s1134 = sand.u32 %s207, 1
          %s1135 = scalar_lea.sflag [#allocation4], %s1134
          %s1136 = sand.u32 %s207, 1
          %s1137 = smul.addr %s1136, 8
          %s1138 = scalar_lea.vmem [#allocation5], %s1137
          %1139 = dma.done %s1135, 128
        $region68: #{tpu_custom_call.1} parent=63 // pred_fallthru
          _
      $region64: #{tpu_custom_call.1} parent=5 // pred_fallthru
        _
    $region6: #{tpu_custom_call.1} parent=1 // loop_footer
      %s24 = sadd.s32 1, %s20
    $region7: #{tpu_custom_call.1} parent=1 // loop_footer_branch
      %19 = sbr.rel target = $region3
    $region8: #{tpu_custom_call.1} parent=1 // loop_exit
      _
    %1140 = vsyncpa [#allocation3], 1
    %s1141 = scalar_lea.sflag [#allocation3], 1
    %1142 = vsyncpa %s1141, 1
    %1143 = vsyncpa [#allocation4], 1
    %s1144 = scalar_lea.sflag [#allocation4], 1
    %1145 = vsyncpa %s1144, 1

</llo_original>
